<compile_context>
chip_gen: v5e
topology: v5e:2x2
jax: 0.10.0
libtpu: 0.0.40
codegen_flags: <defaults>
</compile_context>

<pallas_src>
import jax
import jax.numpy as jnp
from jax.experimental import pallas as pl
from jax.experimental.pallas import tpu as pltpu


def _mul_conv1x1_kernel(scale_ref, x_ref, w_ref, o_ref):
    # scale_ref: (1, Cin)        -- per-channel scale for this batch image
    # x_ref:     (1, Cin, HW)    -- channel-major activations
    # w_ref:     (Cout, Cin)     -- 1x1 conv weight
    # o_ref:     (1, Cout, HW)
    ws = w_ref[...] * scale_ref[...]            # fold scale into weight (VPU, sublane bcast)
    o_ref[0] = jnp.dot(
        ws, x_ref[0], preferred_element_type=jnp.float32
    ).astype(o_ref.dtype)                        # 1x1 conv == (Cout,Cin)@(Cin,HW) on MXU


def mul_conv1x1(x270, x265, weight):
    """
    x270:   (N, Cin, 1, 1)    float32   per-channel multiplier
    x265:   (N, Cin, H, W)    float32   feature map
    weight: (Cout, Cin, 1, 1) float32   PyTorch Conv2d weight
    returns (N, Cout, H, W)   float32
    """
    n, cin, h, w = x265.shape
    cout = weight.shape[0]
    hw = h * w

    x_mat = x265.reshape(n, cin, hw)        # free reshape (channel-major, no transpose)
    scale = x270.reshape(n, cin)            # per-batch, per-channel scale
    w_mat = weight.reshape(cout, cin)       # free reshape

    out = pl.pallas_call(
        _mul_conv1x1_kernel,
        out_shape=jax.ShapeDtypeStruct((n, cout, hw), x265.dtype),
        grid=(n,),
        in_specs=[
            pl.BlockSpec((1, cin), lambda i: (i, 0)),
            pl.BlockSpec((1, cin, hw), lambda i: (i, 0, 0)),
            pl.BlockSpec((cout, cin), lambda i: (0, 0)),
        ],
        out_specs=pl.BlockSpec((1, cout, hw), lambda i: (i, 0, 0)),
        compiler_params=pltpu.CompilerParams(
            dimension_semantics=("arbitrary",),
        ),
    )(scale, x_mat, w_mat)

    return out.reshape(n, cout, h, w)       # free reshape back to NCHW


if __name__ == "__main__":
    key = jax.random.PRNGKey(0)
    k1, k2, k3 = jax.random.split(key, 3)

    # Shapes implied by the module: Conv2d(816, 136, 1x1), input (1, 816, 14, 14)
    N, Cin, H, W, Cout = 1, 816, 14, 14, 136
    x265 = jax.random.normal(k1, (N, Cin, H, W), dtype=jnp.float32)
    x270 = jax.random.normal(k2, (N, Cin, 1, 1), dtype=jnp.float32)
    weight = jax.random.normal(k3, (Cout, Cin, 1, 1), dtype=jnp.float32) * 0.02

    out = mul_conv1x1(x270, x265, weight)
    jax.block_until_ready(out)

    # reference check in plain JAX
    ref = jnp.einsum(
        "nchw,oc->nohw", x265 * x270, weight.reshape(Cout, Cin)
    )
    assert out.shape == (N, Cout, H, W)
    assert jnp.allclose(out, ref, atol=1e-3, rtol=1e-3)

    print("KERNEL_OK")
</pallas_src>

<mosaic_0001>
module attributes {stable_mosaic.version = 11 : i64} {
  func.func @_mul_conv1x1_kernel(%arg0: i32, %arg1: memref<1x816xf32, #tpu.memory_space<vmem>>, %arg2: memref<1x816x196xf32, #tpu.memory_space<vmem>>, %arg3: memref<136x816xf32, #tpu.memory_space<vmem>>, %arg4: memref<1x136x196xf32, #tpu.memory_space<vmem>>) attributes {dimension_semantics = [#tpu.dimension_semantics<arbitrary>], iteration_bounds = array<i64: 1>, scalar_prefetch = 0 : i64, scratch_operands = 0 : i64, tpu.core_type = #tpu.core_type<tc>, window_params = [{transform_indices = @transform_0, window_bounds = array<i64: 1, 816>}, {transform_indices = @transform_1, window_bounds = array<i64: 1, 816, 196>}, {pipeline_mode = #tpu.pipeline_mode<synchronous>, transform_indices = @transform_2, window_bounds = array<i64: 136, 816>}, {transform_indices = @transform_3, window_bounds = array<i64: 1, 136, 196>}]} {
    %c0 = arith.constant 0 : index
    %c0_0 = arith.constant 0 : index
    %0 = vector.load %arg3[%c0, %c0_0] : memref<136x816xf32, #tpu.memory_space<vmem>>, vector<136x816xf32>
    %c0_1 = arith.constant 0 : index
    %c0_2 = arith.constant 0 : index
    %1 = vector.load %arg1[%c0_1, %c0_2] : memref<1x816xf32, #tpu.memory_space<vmem>>, vector<1x816xf32>
    %2 = vector.broadcast %1 : vector<1x816xf32> to vector<136x816xf32>
    %3 = arith.mulf %0, %2 : vector<136x816xf32>
    %c0_3 = arith.constant 0 : index
    %c0_4 = arith.constant 0 : index
    %c0_5 = arith.constant 0 : index
    %4 = vector.load %arg2[%c0_3, %c0_4, %c0_5] : memref<1x816x196xf32, #tpu.memory_space<vmem>>, vector<1x816x196xf32>
    %5 = vector.shape_cast %4 : vector<1x816x196xf32> to vector<816x196xf32>
    %cst = arith.constant dense<0.000000e+00> : vector<136x196xf32>
    %6 = tpu.matmul %3, %5, %cst {dimension_numbers = #tpu.dot_dimension_numbers<[1], [0], [0], [1], [0, 0, 1, 1], [], []>} : vector<136x816xf32>, vector<816x196xf32>, vector<136x196xf32> -> vector<136x196xf32>
    %c0_6 = arith.constant 0 : index
    %c0_7 = arith.constant 0 : index
    %c0_8 = arith.constant 0 : index
    %7 = vector.load %arg4[%c0_6, %c0_7, %c0_8] : memref<1x136x196xf32, #tpu.memory_space<vmem>>, vector<1x136x196xf32>
    %8 = vector.shape_cast %7 : vector<1x136x196xf32> to vector<136x196xf32>
    %9 = vector.shape_cast %6 : vector<136x196xf32> to vector<1x136x196xf32>
    tpu.vector_store %arg4[%c0_6, %c0_7, %c0_8], %9 {strides = array<i32>} : memref<1x136x196xf32, #tpu.memory_space<vmem>>, vector<1x136x196xf32>,
    return
  }
  func.func @transform_0(%arg0: i32) -> (i32, i32) {
    %c0_i32 = arith.constant 0 : i32
    %c0_i32_0 = arith.constant 0 : i32
    return %arg0, %c0_i32 : i32, i32
  }
  func.func @transform_1(%arg0: i32) -> (i32, i32, i32) {
    %c0_i32 = arith.constant 0 : i32
    %c0_i32_0 = arith.constant 0 : i32
    %c0_i32_1 = arith.constant 0 : i32
    return %arg0, %c0_i32, %c0_i32_0 : i32, i32, i32
  }
  func.func @transform_2(%arg0: i32) -> (i32, i32) {
    %c0_i32 = arith.constant 0 : i32
    %c0_i32_0 = arith.constant 0 : i32
    %c0_i32_1 = arith.constant 0 : i32
    return %c0_i32, %c0_i32_0 : i32, i32
  }
  func.func @transform_3(%arg0: i32) -> (i32, i32, i32) {
    %c0_i32 = arith.constant 0 : i32
    %c0_i32_0 = arith.constant 0 : i32
    %c0_i32_1 = arith.constant 0 : i32
    return %arg0, %c0_i32, %c0_i32_0 : i32, i32, i32
  }
}

</mosaic_0001>

<llo_original>
// kernel: tpu_custom_call.1
$region0: #{tpu_custom_call.1}
  #allocation0 [shape = 'u32[]', space=smem, size = 0x4, offset = 0x4, fixed_abs, tag = 'smem constant byte address 0x4 - core index']
  #allocation1 [shape = 'u32[72,128]{1,0:T(1,128)}', space=vmem, size = 0x9000, scoped, tag = 'internal scratch']
  %s0 = inlined_call_operand.vmem [shape: f32[1,816], index: 0, kind: input, shape index: {}]
  %s1 = inlined_call_operand.vmem [shape: f32[1,816,196], index: 1, kind: input, shape index: {}]
  %s2 = inlined_call_operand.vmem [shape: f32[136,816], index: 2, kind: input, shape index: {}]
  %s3 = inlined_call_operand.hbm [shape: f32[1,136,196], index: 3, kind: output, shape index: {}]
  %s4 = sld [smem:[#allocation0]]
  $region22: #{tpu_custom_call.1} parent=0
    _
  %s6 = ssub.s32 1, %s4
  %s7 = scalar_select 0, %s6, %s4
  $region1: #{tpu_custom_call.1} parent=0
    #allocation2 [shape = 'u8[139264]{0}', space=vmem, size = 0x22000, scoped, tag = 'output window, operand 0, single buffered']
    #allocation3 [shape = 's32[1]{0}', space=sflag, size = 0x4, scoped, tag = 'scoped memory for tpu_custom_call.1']
    %8 = vsyncpa [#allocation3], 0
    // Predicated region
    $region2: #{tpu_custom_call.1} parent=1 // pred_check
      _
    $region3: #{tpu_custom_call.1} parent=1 // pred_check_branch
      %10 = sbr.rel (0) target = $region5
    $region4: #{tpu_custom_call.1} parent=1 // pred_region
      _
    $region5: #{tpu_custom_call.1} parent=1 // pred_fallthru
      _
    // Predicated region
    $region6: #{tpu_custom_call.1} parent=1 // pred_check
      _
    $region7: #{tpu_custom_call.1} parent=1 // pred_check_branch
      %12 = sbr.rel (0) target = $region9
    $region8: #{tpu_custom_call.1} parent=1 // pred_region
      _
    $region9: #{tpu_custom_call.1} parent=1 // pred_fallthru
      _
    // Predicated region
    $region10: #{tpu_custom_call.1} parent=1 // pred_check
      _
    $region11: #{tpu_custom_call.1} parent=1 // pred_check_branch
      %14 = sbr.rel (0) target = $region13
    $region12: #{tpu_custom_call.1} parent=1 // pred_region
      _
    $region13: #{tpu_custom_call.1} parent=1 // pred_fallthru
      _
    %v15 = vld [vmem:[%s2] sm:$0xff]
    %v16 = vld [vmem:[%s2 + $0x8] sm:$0xff]
    %v17 = vld [vmem:[%s2 + $0x10] sm:$0xff]
    %v18 = vld [vmem:[%s2 + $0x18] sm:$0xff]
    %v19 = vld [vmem:[%s2 + $0x20] sm:$0xff]
    %v20 = vld [vmem:[%s2 + $0x28] sm:$0xff]
    %v21 = vld [vmem:[%s2 + $0x30] sm:$0xff]
    %v22 = vld [vmem:[%s2 + $0x38] sm:$0xff]
    %v23 = vld [vmem:[%s2 + $0x40] sm:$0xff]
    %v24 = vld [vmem:[%s2 + $0x48] sm:$0xff]
    %v25 = vld [vmem:[%s2 + $0x50] sm:$0xff]
    %v26 = vld [vmem:[%s2 + $0x58] sm:$0xff]
    %v27 = vld [vmem:[%s2 + $0x60] sm:$0xff]
    %v28 = vld [vmem:[%s2 + $0x68] sm:$0xff]
    %v29 = vld [vmem:[%s2 + $0x70] sm:$0xff]
    %v30 = vld [vmem:[%s2 + $0x78] sm:$0xff]
    %v31 = vld [vmem:[%s2 + $0x80] sm:$0xff]
    %v32 = vld [vmem:[%s2 + $0x88] sm:$0xff]
    %v33 = vld [vmem:[%s2 + $0x90] sm:$0xff]
    %v34 = vld [vmem:[%s2 + $0x98] sm:$0xff]
    %v35 = vld [vmem:[%s2 + $0xa0] sm:$0xff]
    %v36 = vld [vmem:[%s2 + $0xa8] sm:$0xff]
    %v37 = vld [vmem:[%s2 + $0xb0] sm:$0xff]
    %v38 = vld [vmem:[%s2 + $0xb8] sm:$0xff]
    %v39 = vld [vmem:[%s2 + $0xc0] sm:$0xff]
    %v40 = vld [vmem:[%s2 + $0xc8] sm:$0xff]
    %v41 = vld [vmem:[%s2 + $0xd0] sm:$0xff]
    %v42 = vld [vmem:[%s2 + $0xd8] sm:$0xff]
    %v43 = vld [vmem:[%s2 + $0xe0] sm:$0xff]
    %v44 = vld [vmem:[%s2 + $0xe8] sm:$0xff]
    %v45 = vld [vmem:[%s2 + $0xf0] sm:$0xff]
    %v46 = vld [vmem:[%s2 + $0xf8] sm:$0xff]
    %v47 = vld [vmem:[%s2 + $0x100] sm:$0xff]
    %v48 = vld [vmem:[%s2 + $0x108] sm:$0xff]
    %v49 = vld [vmem:[%s2 + $0x110] sm:$0xff]
    %v50 = vld [vmem:[%s2 + $0x118] sm:$0xff]
    %v51 = vld [vmem:[%s2 + $0x120] sm:$0xff]
    %v52 = vld [vmem:[%s2 + $0x128] sm:$0xff]
    %v53 = vld [vmem:[%s2 + $0x130] sm:$0xff]
    %v54 = vld [vmem:[%s2 + $0x138] sm:$0xff]
    %v55 = vld [vmem:[%s2 + $0x140] sm:$0xff]
    %v56 = vld [vmem:[%s2 + $0x148] sm:$0xff]
    %v57 = vld [vmem:[%s2 + $0x150] sm:$0xff]
    %v58 = vld [vmem:[%s2 + $0x158] sm:$0xff]
    %v59 = vld [vmem:[%s2 + $0x160] sm:$0xff]
    %v60 = vld [vmem:[%s2 + $0x168] sm:$0xff]
    %v61 = vld [vmem:[%s2 + $0x170] sm:$0xff]
    %v62 = vld [vmem:[%s2 + $0x178] sm:$0xff]
    %v63 = vld [vmem:[%s2 + $0x180] sm:$0xff]
    %v64 = vld [vmem:[%s2 + $0x188] sm:$0xff]
    %v65 = vld [vmem:[%s2 + $0x190] sm:$0xff]
    %v66 = vld [vmem:[%s2 + $0x198] sm:$0xff]
    %v67 = vld [vmem:[%s2 + $0x1a0] sm:$0xff]
    %v68 = vld [vmem:[%s2 + $0x1a8] sm:$0xff]
    %v69 = vld [vmem:[%s2 + $0x1b0] sm:$0xff]
    %v70 = vld [vmem:[%s2 + $0x1b8] sm:$0xff]
    %v71 = vld [vmem:[%s2 + $0x1c0] sm:$0xff]
    %v72 = vld [vmem:[%s2 + $0x1c8] sm:$0xff]
    %v73 = vld [vmem:[%s2 + $0x1d0] sm:$0xff]
    %v74 = vld [vmem:[%s2 + $0x1d8] sm:$0xff]
    %v75 = vld [vmem:[%s2 + $0x1e0] sm:$0xff]
    %v76 = vld [vmem:[%s2 + $0x1e8] sm:$0xff]
    %v77 = vld [vmem:[%s2 + $0x1f0] sm:$0xff]
    %v78 = vld [vmem:[%s2 + $0x1f8] sm:$0xff]
    %v79 = vld [vmem:[%s2 + $0x200] sm:$0xff]
    %v80 = vld [vmem:[%s2 + $0x208] sm:$0xff]
    %v81 = vld [vmem:[%s2 + $0x210] sm:$0xff]
    %v82 = vld [vmem:[%s2 + $0x218] sm:$0xff]
    %v83 = vld [vmem:[%s2 + $0x220] sm:$0xff]
    %v84 = vld [vmem:[%s2 + $0x228] sm:$0xff]
    %v85 = vld [vmem:[%s2 + $0x230] sm:$0xff]
    %v86 = vld [vmem:[%s2 + $0x238] sm:$0xff]
    %v87 = vld [vmem:[%s2 + $0x240] sm:$0xff]
    %v88 = vld [vmem:[%s2 + $0x248] sm:$0xff]
    %v89 = vld [vmem:[%s2 + $0x250] sm:$0xff]
    %v90 = vld [vmem:[%s2 + $0x258] sm:$0xff]
    %v91 = vld [vmem:[%s2 + $0x260] sm:$0xff]
    %v92 = vld [vmem:[%s2 + $0x268] sm:$0xff]
    %v93 = vld [vmem:[%s2 + $0x270] sm:$0xff]
    %v94 = vld [vmem:[%s2 + $0x278] sm:$0xff]
    %v95 = vld [vmem:[%s2 + $0x280] sm:$0xff]
    %v96 = vld [vmem:[%s2 + $0x288] sm:$0xff]
    %v97 = vld [vmem:[%s2 + $0x290] sm:$0xff]
    %v98 = vld [vmem:[%s2 + $0x298] sm:$0xff]
    %v99 = vld [vmem:[%s2 + $0x2a0] sm:$0xff]
    %v100 = vld [vmem:[%s2 + $0x2a8] sm:$0xff]
    %v101 = vld [vmem:[%s2 + $0x2b0] sm:$0xff]
    %v102 = vld [vmem:[%s2 + $0x2b8] sm:$0xff]
    %v103 = vld [vmem:[%s2 + $0x2c0] sm:$0xff]
    %v104 = vld [vmem:[%s2 + $0x2c8] sm:$0xff]
    %v105 = vld [vmem:[%s2 + $0x2d0] sm:$0xff]
    %v106 = vld [vmem:[%s2 + $0x2d8] sm:$0xff]
    %v107 = vld [vmem:[%s2 + $0x2e0] sm:$0xff]
    %v108 = vld [vmem:[%s2 + $0x2e8] sm:$0xff]
    %v109 = vld [vmem:[%s2 + $0x2f0] sm:$0xff]
    %v110 = vld [vmem:[%s2 + $0x2f8] sm:$0xff]
    %v111 = vld [vmem:[%s2 + $0x300] sm:$0xff]
    %v112 = vld [vmem:[%s2 + $0x308] sm:$0xff]
    %v113 = vld [vmem:[%s2 + $0x310] sm:$0xff]
    %v114 = vld [vmem:[%s2 + $0x318] sm:$0xff]
    %v115 = vld [vmem:[%s2 + $0x320] sm:$0xff]
    %v116 = vld [vmem:[%s2 + $0x328] sm:$0xff]
    %v117 = vld [vmem:[%s2 + $0x330] sm:$0xff]
    %v118 = vld [vmem:[%s2 + $0x338] sm:$0xff]
    %v119 = vld [vmem:[%s2 + $0x340] sm:$0xff]
    %v120 = vld [vmem:[%s2 + $0x348] sm:$0xff]
    %v121 = vld [vmem:[%s2 + $0x350] sm:$0xff]
    %v122 = vld [vmem:[%s2 + $0x358] sm:$0xff]
    %v123 = vld [vmem:[%s2 + $0x360] sm:$0xff]
    %v124 = vld [vmem:[%s2 + $0x368] sm:$0xff]
    %v125 = vld [vmem:[%s2 + $0x370] sm:$0xff]
    %v126 = vld [vmem:[%s2 + $0x378] sm:$0xff]
    %v127 = vld [vmem:[%s2 + $0x380] sm:$0xff]
    %v128 = vld [vmem:[%s2 + $0x388] sm:$0xff]
    %v129 = vld [vmem:[%s2 + $0x390] sm:$0xff]
    %v130 = vld [vmem:[%s2 + $0x398] sm:$0xff]
    %v131 = vld [vmem:[%s2 + $0x3a0] sm:$0xff]
    %v132 = vld [vmem:[%s2 + $0x3a8] sm:$0xff]
    %v133 = vld [vmem:[%s2 + $0x3b0] sm:$0xff]
    %v134 = vld [vmem:[%s0] sm:$0x7f]
    %v136 = vperm.slane %v134, 0
    %v137 = vperm.slane %v134, 1
    %v138 = vperm.slane %v134, 2
    %v139 = vperm.slane %v134, 3
    %v140 = vperm.slane %v134, 4
    %v141 = vperm.slane %v134, 5
    %v142 = vperm.slane %v134, 6
    %v150 = vmul.f32 %v15, %v136
    %v151 = vmul.f32 %v16, %v137
    %v152 = vmul.f32 %v17, %v138
    %v153 = vmul.f32 %v18, %v139
    %v154 = vmul.f32 %v19, %v140
    %v155 = vmul.f32 %v20, %v141
    %v156 = vmul.f32 %v21, %v142
    %v157 = vmul.f32 %v22, %v136
    %v158 = vmul.f32 %v23, %v137
    %v159 = vmul.f32 %v24, %v138
    %v160 = vmul.f32 %v25, %v139
    %v161 = vmul.f32 %v26, %v140
    %v162 = vmul.f32 %v27, %v141
    %v163 = vmul.f32 %v28, %v142
    %v164 = vmul.f32 %v29, %v136
    %v165 = vmul.f32 %v30, %v137
    %v166 = vmul.f32 %v31, %v138
    %v167 = vmul.f32 %v32, %v139
    %v168 = vmul.f32 %v33, %v140
    %v169 = vmul.f32 %v34, %v141
    %v170 = vmul.f32 %v35, %v142
    %v171 = vmul.f32 %v36, %v136
    %v172 = vmul.f32 %v37, %v137
    %v173 = vmul.f32 %v38, %v138
    %v174 = vmul.f32 %v39, %v139
    %v175 = vmul.f32 %v40, %v140
    %v176 = vmul.f32 %v41, %v141
    %v177 = vmul.f32 %v42, %v142
    %v178 = vmul.f32 %v43, %v136
    %v179 = vmul.f32 %v44, %v137
    %v180 = vmul.f32 %v45, %v138
    %v181 = vmul.f32 %v46, %v139
    %v182 = vmul.f32 %v47, %v140
    %v183 = vmul.f32 %v48, %v141
    %v184 = vmul.f32 %v49, %v142
    %v185 = vmul.f32 %v50, %v136
    %v186 = vmul.f32 %v51, %v137
    %v187 = vmul.f32 %v52, %v138
    %v188 = vmul.f32 %v53, %v139
    %v189 = vmul.f32 %v54, %v140
    %v190 = vmul.f32 %v55, %v141
    %v191 = vmul.f32 %v56, %v142
    %v192 = vmul.f32 %v57, %v136
    %v193 = vmul.f32 %v58, %v137
    %v194 = vmul.f32 %v59, %v138
    %v195 = vmul.f32 %v60, %v139
    %v196 = vmul.f32 %v61, %v140
    %v197 = vmul.f32 %v62, %v141
    %v198 = vmul.f32 %v63, %v142
    %v199 = vmul.f32 %v64, %v136
    %v200 = vmul.f32 %v65, %v137
    %v201 = vmul.f32 %v66, %v138
    %v202 = vmul.f32 %v67, %v139
    %v203 = vmul.f32 %v68, %v140
    %v204 = vmul.f32 %v69, %v141
    %v205 = vmul.f32 %v70, %v142
    %v206 = vmul.f32 %v71, %v136
    %v207 = vmul.f32 %v72, %v137
    %v208 = vmul.f32 %v73, %v138
    %v209 = vmul.f32 %v74, %v139
    %v210 = vmul.f32 %v75, %v140
    %v211 = vmul.f32 %v76, %v141
    %v212 = vmul.f32 %v77, %v142
    %v213 = vmul.f32 %v78, %v136
    %v214 = vmul.f32 %v79, %v137
    %v215 = vmul.f32 %v80, %v138
    %v216 = vmul.f32 %v81, %v139
    %v217 = vmul.f32 %v82, %v140
    %v218 = vmul.f32 %v83, %v141
    %v219 = vmul.f32 %v84, %v142
    %v220 = vmul.f32 %v85, %v136
    %v221 = vmul.f32 %v86, %v137
    %v222 = vmul.f32 %v87, %v138
    %v223 = vmul.f32 %v88, %v139
    %v224 = vmul.f32 %v89, %v140
    %v225 = vmul.f32 %v90, %v141
    %v226 = vmul.f32 %v91, %v142
    %v227 = vmul.f32 %v92, %v136
    %v228 = vmul.f32 %v93, %v137
    %v229 = vmul.f32 %v94, %v138
    %v230 = vmul.f32 %v95, %v139
    %v231 = vmul.f32 %v96, %v140
    %v232 = vmul.f32 %v97, %v141
    %v233 = vmul.f32 %v98, %v142
    %v234 = vmul.f32 %v99, %v136
    %v235 = vmul.f32 %v100, %v137
    %v236 = vmul.f32 %v101, %v138
    %v237 = vmul.f32 %v102, %v139
    %v238 = vmul.f32 %v103, %v140
    %v239 = vmul.f32 %v104, %v141
    %v240 = vmul.f32 %v105, %v142
    %v241 = vmul.f32 %v106, %v136
    %v242 = vmul.f32 %v107, %v137
    %v243 = vmul.f32 %v108, %v138
    %v244 = vmul.f32 %v109, %v139
    %v245 = vmul.f32 %v110, %v140
    %v246 = vmul.f32 %v111, %v141
    %v247 = vmul.f32 %v112, %v142
    %v248 = vmul.f32 %v113, %v136
    %v249 = vmul.f32 %v114, %v137
    %v250 = vmul.f32 %v115, %v138
    %v251 = vmul.f32 %v116, %v139
    %v252 = vmul.f32 %v117, %v140
    %v253 = vmul.f32 %v118, %v141
    %v254 = vmul.f32 %v119, %v142
    %v255 = vmul.f32 %v120, %v136
    %v256 = vmul.f32 %v121, %v137
    %v257 = vmul.f32 %v122, %v138
    %v258 = vmul.f32 %v123, %v139
    %v259 = vmul.f32 %v124, %v140
    %v260 = vmul.f32 %v125, %v141
    %v261 = vmul.f32 %v126, %v142
    %v262 = vmul.f32 %v127, %v136
    %v263 = vmul.f32 %v128, %v137
    %v264 = vmul.f32 %v129, %v138
    %v265 = vmul.f32 %v130, %v139
    %v266 = vmul.f32 %v131, %v140
    %v267 = vmul.f32 %v132, %v141
    %v268 = vmul.f32 %v133, %v142
    %v269 = vld [vmem:[%s1] sm:$0xff]
    %v270 = vld [vmem:[%s1 + $0x8] sm:$0xff]
    %v271 = vld [vmem:[%s1 + $0x10] sm:$0xff]
    %v272 = vld [vmem:[%s1 + $0x18] sm:$0xff]
    %v273 = vld [vmem:[%s1 + $0x20] sm:$0xff]
    %v274 = vld [vmem:[%s1 + $0x28] sm:$0xff]
    %v275 = vld [vmem:[%s1 + $0x30] sm:$0xff]
    %v276 = vld [vmem:[%s1 + $0x38] sm:$0xff]
    %v277 = vld [vmem:[%s1 + $0x40] sm:$0xff]
    %v278 = vld [vmem:[%s1 + $0x48] sm:$0xff]
    %v279 = vld [vmem:[%s1 + $0x50] sm:$0xff]
    %v280 = vld [vmem:[%s1 + $0x58] sm:$0xff]
    %v281 = vld [vmem:[%s1 + $0x60] sm:$0xff]
    %v282 = vld [vmem:[%s1 + $0x68] sm:$0xff]
    %v283 = vld [vmem:[%s1 + $0x70] sm:$0xff]
    %v284 = vld [vmem:[%s1 + $0x78] sm:$0xff]
    %v285 = vld [vmem:[%s1 + $0x80] sm:$0xff]
    %v286 = vld [vmem:[%s1 + $0x88] sm:$0xff]
    %v287 = vld [vmem:[%s1 + $0x90] sm:$0xff]
    %v288 = vld [vmem:[%s1 + $0x98] sm:$0xff]
    %v289 = vld [vmem:[%s1 + $0xa0] sm:$0xff]
    %v290 = vld [vmem:[%s1 + $0xa8] sm:$0xff]
    %v291 = vld [vmem:[%s1 + $0xb0] sm:$0xff]
    %v292 = vld [vmem:[%s1 + $0xb8] sm:$0xff]
    %v293 = vld [vmem:[%s1 + $0xc0] sm:$0xff]
    %v294 = vld [vmem:[%s1 + $0xc8] sm:$0xff]
    %v295 = vld [vmem:[%s1 + $0xd0] sm:$0xff]
    %v296 = vld [vmem:[%s1 + $0xd8] sm:$0xff]
    %v297 = vld [vmem:[%s1 + $0xe0] sm:$0xff]
    %v298 = vld [vmem:[%s1 + $0xe8] sm:$0xff]
    %v299 = vld [vmem:[%s1 + $0xf0] sm:$0xff]
    %v300 = vld [vmem:[%s1 + $0xf8] sm:$0xff]
    %v301 = vld [vmem:[%s1 + $0x100] sm:$0xff]
    %v302 = vld [vmem:[%s1 + $0x108] sm:$0xff]
    %v303 = vld [vmem:[%s1 + $0x110] sm:$0xff]
    %v304 = vld [vmem:[%s1 + $0x118] sm:$0xff]
    %v305 = vld [vmem:[%s1 + $0x120] sm:$0xff]
    %v306 = vld [vmem:[%s1 + $0x128] sm:$0xff]
    %v307 = vld [vmem:[%s1 + $0x130] sm:$0xff]
    %v308 = vld [vmem:[%s1 + $0x138] sm:$0xff]
    %v309 = vld [vmem:[%s1 + $0x140] sm:$0xff]
    %v310 = vld [vmem:[%s1 + $0x148] sm:$0xff]
    %v311 = vld [vmem:[%s1 + $0x150] sm:$0xff]
    %v312 = vld [vmem:[%s1 + $0x158] sm:$0xff]
    %v313 = vld [vmem:[%s1 + $0x160] sm:$0xff]
    %v314 = vld [vmem:[%s1 + $0x168] sm:$0xff]
    %v315 = vld [vmem:[%s1 + $0x170] sm:$0xff]
    %v316 = vld [vmem:[%s1 + $0x178] sm:$0xff]
    %v317 = vld [vmem:[%s1 + $0x180] sm:$0xff]
    %v318 = vld [vmem:[%s1 + $0x188] sm:$0xff]
    %v319 = vld [vmem:[%s1 + $0x190] sm:$0xff]
    %v320 = vld [vmem:[%s1 + $0x198] sm:$0xff]
    %v321 = vld [vmem:[%s1 + $0x1a0] sm:$0xff]
    %v322 = vld [vmem:[%s1 + $0x1a8] sm:$0xff]
    %v323 = vld [vmem:[%s1 + $0x1b0] sm:$0xff]
    %v324 = vld [vmem:[%s1 + $0x1b8] sm:$0xff]
    %v325 = vld [vmem:[%s1 + $0x1c0] sm:$0xff]
    %v326 = vld [vmem:[%s1 + $0x1c8] sm:$0xff]
    %v327 = vld [vmem:[%s1 + $0x1d0] sm:$0xff]
    %v328 = vld [vmem:[%s1 + $0x1d8] sm:$0xff]
    %v329 = vld [vmem:[%s1 + $0x1e0] sm:$0xff]
    %v330 = vld [vmem:[%s1 + $0x1e8] sm:$0xff]
    %v331 = vld [vmem:[%s1 + $0x1f0] sm:$0xff]
    %v332 = vld [vmem:[%s1 + $0x1f8] sm:$0xff]
    %v333 = vld [vmem:[%s1 + $0x200] sm:$0xff]
    %v334 = vld [vmem:[%s1 + $0x208] sm:$0xff]
    %v335 = vld [vmem:[%s1 + $0x210] sm:$0xff]
    %v336 = vld [vmem:[%s1 + $0x218] sm:$0xff]
    %v337 = vld [vmem:[%s1 + $0x220] sm:$0xff]
    %v338 = vld [vmem:[%s1 + $0x228] sm:$0xff]
    %v339 = vld [vmem:[%s1 + $0x230] sm:$0xff]
    %v340 = vld [vmem:[%s1 + $0x238] sm:$0xff]
    %v341 = vld [vmem:[%s1 + $0x240] sm:$0xff]
    %v342 = vld [vmem:[%s1 + $0x248] sm:$0xff]
    %v343 = vld [vmem:[%s1 + $0x250] sm:$0xff]
    %v344 = vld [vmem:[%s1 + $0x258] sm:$0xff]
    %v345 = vld [vmem:[%s1 + $0x260] sm:$0xff]
    %v346 = vld [vmem:[%s1 + $0x268] sm:$0xff]
    %v347 = vld [vmem:[%s1 + $0x270] sm:$0xff]
    %v348 = vld [vmem:[%s1 + $0x278] sm:$0xff]
    %v349 = vld [vmem:[%s1 + $0x280] sm:$0xff]
    %v350 = vld [vmem:[%s1 + $0x288] sm:$0xff]
    %v351 = vld [vmem:[%s1 + $0x290] sm:$0xff]
    %v352 = vld [vmem:[%s1 + $0x298] sm:$0xff]
    %v353 = vld [vmem:[%s1 + $0x2a0] sm:$0xff]
    %v354 = vld [vmem:[%s1 + $0x2a8] sm:$0xff]
    %v355 = vld [vmem:[%s1 + $0x2b0] sm:$0xff]
    %v356 = vld [vmem:[%s1 + $0x2b8] sm:$0xff]
    %v357 = vld [vmem:[%s1 + $0x2c0] sm:$0xff]
    %v358 = vld [vmem:[%s1 + $0x2c8] sm:$0xff]
    %v359 = vld [vmem:[%s1 + $0x2d0] sm:$0xff]
    %v360 = vld [vmem:[%s1 + $0x2d8] sm:$0xff]
    %v361 = vld [vmem:[%s1 + $0x2e0] sm:$0xff]
    %v362 = vld [vmem:[%s1 + $0x2e8] sm:$0xff]
    %v363 = vld [vmem:[%s1 + $0x2f0] sm:$0xff]
    %v364 = vld [vmem:[%s1 + $0x2f8] sm:$0xff]
    %v365 = vld [vmem:[%s1 + $0x300] sm:$0xff]
    %v366 = vld [vmem:[%s1 + $0x308] sm:$0xff]
    %v367 = vld [vmem:[%s1 + $0x310] sm:$0xff]
    %v368 = vld [vmem:[%s1 + $0x318] sm:$0xff]
    %v369 = vld [vmem:[%s1 + $0x320] sm:$0xff]
    %v370 = vld [vmem:[%s1 + $0x328] sm:$0xff]
    %v371 = vld [vmem:[%s1 + $0x330] sm:$0xff]
    %v372 = vld [vmem:[%s1 + $0x338] sm:$0xff]
    %v373 = vld [vmem:[%s1 + $0x340] sm:$0xff]
    %v374 = vld [vmem:[%s1 + $0x348] sm:$0xff]
    %v375 = vld [vmem:[%s1 + $0x350] sm:$0xff]
    %v376 = vld [vmem:[%s1 + $0x358] sm:$0xff]
    %v377 = vld [vmem:[%s1 + $0x360] sm:$0xff]
    %v378 = vld [vmem:[%s1 + $0x368] sm:$0xff]
    %v379 = vld [vmem:[%s1 + $0x370] sm:$0xff]
    %v380 = vld [vmem:[%s1 + $0x378] sm:$0xff]
    %v381 = vld [vmem:[%s1 + $0x380] sm:$0xff]
    %v382 = vld [vmem:[%s1 + $0x388] sm:$0xff]
    %v383 = vld [vmem:[%s1 + $0x390] sm:$0xff]
    %v384 = vld [vmem:[%s1 + $0x398] sm:$0xff]
    %v385 = vld [vmem:[%s1 + $0x3a0] sm:$0xff]
    %v386 = vld [vmem:[%s1 + $0x3a8] sm:$0xff]
    %v387 = vld [vmem:[%s1 + $0x3b0] sm:$0xff]
    %v388 = vld [vmem:[%s1 + $0x3b8] sm:$0xff]
    %v389 = vld [vmem:[%s1 + $0x3c0] sm:$0xff]
    %v390 = vld [vmem:[%s1 + $0x3c8] sm:$0xff]
    %v391 = vld [vmem:[%s1 + $0x3d0] sm:$0xff]
    %v392 = vld [vmem:[%s1 + $0x3d8] sm:$0xff]
    %v393 = vld [vmem:[%s1 + $0x3e0] sm:$0xff]
    %v394 = vld [vmem:[%s1 + $0x3e8] sm:$0xff]
    %v395 = vld [vmem:[%s1 + $0x3f0] sm:$0xff]
    %v396 = vld [vmem:[%s1 + $0x3f8] sm:$0xff]
    %v397 = vld [vmem:[%s1 + $0x400] sm:$0xff]
    %v398 = vld [vmem:[%s1 + $0x408] sm:$0xff]
    %v399 = vld [vmem:[%s1 + $0x410] sm:$0xff]
    %v400 = vld [vmem:[%s1 + $0x418] sm:$0xff]
    %v401 = vld [vmem:[%s1 + $0x420] sm:$0xff]
    %v402 = vld [vmem:[%s1 + $0x428] sm:$0xff]
    %v403 = vld [vmem:[%s1 + $0x430] sm:$0xff]
    %v404 = vld [vmem:[%s1 + $0x438] sm:$0xff]
    %v405 = vld [vmem:[%s1 + $0x440] sm:$0xff]
    %v406 = vld [vmem:[%s1 + $0x448] sm:$0xff]
    %v407 = vld [vmem:[%s1 + $0x450] sm:$0xff]
    %v408 = vld [vmem:[%s1 + $0x458] sm:$0xff]
    %v409 = vld [vmem:[%s1 + $0x460] sm:$0xff]
    %v410 = vld [vmem:[%s1 + $0x468] sm:$0xff]
    %v411 = vld [vmem:[%s1 + $0x470] sm:$0xff]
    %v412 = vld [vmem:[%s1 + $0x478] sm:$0xff]
    %v413 = vld [vmem:[%s1 + $0x480] sm:$0xff]
    %v414 = vld [vmem:[%s1 + $0x488] sm:$0xff]
    %v415 = vld [vmem:[%s1 + $0x490] sm:$0xff]
    %v416 = vld [vmem:[%s1 + $0x498] sm:$0xff]
    %v417 = vld [vmem:[%s1 + $0x4a0] sm:$0xff]
    %v418 = vld [vmem:[%s1 + $0x4a8] sm:$0xff]
    %v419 = vld [vmem:[%s1 + $0x4b0] sm:$0xff]
    %v420 = vld [vmem:[%s1 + $0x4b8] sm:$0xff]
    %v421 = vld [vmem:[%s1 + $0x4c0] sm:$0xff]
    %v422 = vld [vmem:[%s1 + $0x4c8] sm:$0xff]
    %v423 = vld [vmem:[%s1 + $0x4d0] sm:$0xff]
    %v424 = vld [vmem:[%s1 + $0x4d8] sm:$0xff]
    %v425 = vld [vmem:[%s1 + $0x4e0] sm:$0xff]
    %v426 = vld [vmem:[%s1 + $0x4e8] sm:$0xff]
    %v427 = vld [vmem:[%s1 + $0x4f0] sm:$0xff]
    %v428 = vld [vmem:[%s1 + $0x4f8] sm:$0xff]
    %v429 = vld [vmem:[%s1 + $0x500] sm:$0xff]
    %v430 = vld [vmem:[%s1 + $0x508] sm:$0xff]
    %v431 = vld [vmem:[%s1 + $0x510] sm:$0xff]
    %v432 = vld [vmem:[%s1 + $0x518] sm:$0xff]
    %v433 = vld [vmem:[%s1 + $0x520] sm:$0xff]
    %v434 = vld [vmem:[%s1 + $0x528] sm:$0xff]
    %v435 = vld [vmem:[%s1 + $0x530] sm:$0xff]
    %v436 = vld [vmem:[%s1 + $0x538] sm:$0xff]
    %v437 = vld [vmem:[%s1 + $0x540] sm:$0xff]
    %v438 = vld [vmem:[%s1 + $0x548] sm:$0xff]
    %v439 = vld [vmem:[%s1 + $0x550] sm:$0xff]
    %v440 = vld [vmem:[%s1 + $0x558] sm:$0xff]
    %v441 = vld [vmem:[%s1 + $0x560] sm:$0xff]
    %v442 = vld [vmem:[%s1 + $0x568] sm:$0xff]
    %v443 = vld [vmem:[%s1 + $0x570] sm:$0xff]
    %v444 = vld [vmem:[%s1 + $0x578] sm:$0xff]
    %v445 = vld [vmem:[%s1 + $0x580] sm:$0xff]
    %v446 = vld [vmem:[%s1 + $0x588] sm:$0xff]
    %v447 = vld [vmem:[%s1 + $0x590] sm:$0xff]
    %v448 = vld [vmem:[%s1 + $0x598] sm:$0xff]
    %v449 = vld [vmem:[%s1 + $0x5a0] sm:$0xff]
    %v450 = vld [vmem:[%s1 + $0x5a8] sm:$0xff]
    %v451 = vld [vmem:[%s1 + $0x5b0] sm:$0xff]
    %v452 = vld [vmem:[%s1 + $0x5b8] sm:$0xff]
    %v453 = vld [vmem:[%s1 + $0x5c0] sm:$0xff]
    %v454 = vld [vmem:[%s1 + $0x5c8] sm:$0xff]
    %v455 = vld [vmem:[%s1 + $0x5d0] sm:$0xff]
    %v456 = vld [vmem:[%s1 + $0x5d8] sm:$0xff]
    %v457 = vld [vmem:[%s1 + $0x5e0] sm:$0xff]
    %v458 = vld [vmem:[%s1 + $0x5e8] sm:$0xff]
    %v459 = vld [vmem:[%s1 + $0x5f0] sm:$0xff]
    %v460 = vld [vmem:[%s1 + $0x5f8] sm:$0xff]
    %v461 = vld [vmem:[%s1 + $0x600] sm:$0xff]
    %v462 = vld [vmem:[%s1 + $0x608] sm:$0xff]
    %v463 = vld [vmem:[%s1 + $0x610] sm:$0xff]
    %v464 = vld [vmem:[%s1 + $0x618] sm:$0xff]
    %v465 = vld [vmem:[%s1 + $0x620] sm:$0xff]
    %v466 = vld [vmem:[%s1 + $0x628] sm:$0xff]
    %v467 = vld [vmem:[%s1 + $0x630] sm:$0xff]
    %v468 = vld [vmem:[%s1 + $0x638] sm:$0xff]
    %v469 = vld [vmem:[%s1 + $0x640] sm:$0xff]
    %v470 = vld [vmem:[%s1 + $0x648] sm:$0xff]
    %v471 = vld [vmem:[%s1 + $0x650] sm:$0xff]
    %v472 = vld [vmem:[%s1 + $0x658] sm:$0xff]
    %vm473 = vcmask 392192
    %v475 = vsel %vm473, %v156, 0
    %v478 = vsel %vm473, %v163, 0
    %v481 = vsel %vm473, %v170, 0
    %v484 = vsel %vm473, %v177, 0
    %v487 = vsel %vm473, %v184, 0
    %v490 = vsel %vm473, %v191, 0
    %v493 = vsel %vm473, %v198, 0
    %v496 = vsel %vm473, %v205, 0
    %v499 = vsel %vm473, %v212, 0
    %v502 = vsel %vm473, %v219, 0
    %v505 = vsel %vm473, %v226, 0
    %v508 = vsel %vm473, %v233, 0
    %v511 = vsel %vm473, %v240, 0
    %v514 = vsel %vm473, %v247, 0
    %v517 = vsel %vm473, %v254, 0
    %v520 = vsel %vm473, %v261, 0
    %v523 = vsel %vm473, %v268, 0
    %525 = vmatpush.msra.mxu0 %v299
    %526 = vmatpush.msra.mxu0 %v297
    %527 = vmatpush.msra.mxu0 %v295
    %528 = vmatpush.msra.mxu0 %v293
    %529 = vmatpush.msra.mxu0 %v291
    %530 = vmatpush.msra.mxu0 %v289
    %531 = vmatpush.msra.mxu0 %v287
    %532 = vmatpush.msra.mxu0 %v285
    %533 = vmatpush.msra.mxu0 %v283
    %534 = vmatpush.msra.mxu0 %v281
    %535 = vmatpush.msra.mxu0 %v279
    %536 = vmatpush.msra.mxu0 %v277
    %537 = vmatpush.msra.mxu0 %v275
    %538 = vmatpush.msra.mxu0 %v273
    %539 = vmatpush.msra.mxu0 %v271
    %540 = vmatpush.msra.mxu0 %v269
    %541 = vmatmul.f32.gmra.mxu0 %v150
    %v542 = vpop.f32.mrf.mxu0
    %v543 = vadd.f32 0.0, %v542
    %544 = vmatmul.f32.gmra.mxu0 %v157
    %v545 = vpop.f32.mrf.mxu0
    %v546 = vadd.f32 0.0, %v545
    %547 = vmatmul.f32.gmra.mxu0 %v164
    %v548 = vpop.f32.mrf.mxu0
    %v549 = vadd.f32 0.0, %v548
    %550 = vmatmul.f32.gmra.mxu0 %v171
    %v551 = vpop.f32.mrf.mxu0
    %v552 = vadd.f32 0.0, %v551
    %553 = vmatmul.f32.gmra.mxu0 %v178
    %v554 = vpop.f32.mrf.mxu0
    %v555 = vadd.f32 0.0, %v554
    %556 = vmatmul.f32.gmra.mxu0 %v185
    %v557 = vpop.f32.mrf.mxu0
    %v558 = vadd.f32 0.0, %v557
    %559 = vmatmul.f32.gmra.mxu0 %v192
    %v560 = vpop.f32.mrf.mxu0
    %v561 = vadd.f32 0.0, %v560
    %562 = vmatmul.f32.gmra.mxu0 %v199
    %v563 = vpop.f32.mrf.mxu0
    %v564 = vadd.f32 0.0, %v563
    %565 = vmatmul.f32.gmra.mxu0 %v206
    %v566 = vpop.f32.mrf.mxu0
    %v567 = vadd.f32 0.0, %v566
    %568 = vmatmul.f32.gmra.mxu0 %v213
    %v569 = vpop.f32.mrf.mxu0
    %v570 = vadd.f32 0.0, %v569
    %571 = vmatmul.f32.gmra.mxu0 %v220
    %v572 = vpop.f32.mrf.mxu0
    %v573 = vadd.f32 0.0, %v572
    %574 = vmatmul.f32.gmra.mxu0 %v227
    %v575 = vpop.f32.mrf.mxu0
    %v576 = vadd.f32 0.0, %v575
    %577 = vmatmul.f32.gmra.mxu0 %v234
    %v578 = vpop.f32.mrf.mxu0
    %v579 = vadd.f32 0.0, %v578
    %580 = vmatmul.f32.gmra.mxu0 %v241
    %v581 = vpop.f32.mrf.mxu0
    %v582 = vadd.f32 0.0, %v581
    %583 = vmatmul.f32.gmra.mxu0 %v248
    %v584 = vpop.f32.mrf.mxu0
    %v585 = vadd.f32 0.0, %v584
    %586 = vmatmul.f32.gmra.mxu0 %v255
    %v587 = vpop.f32.mrf.mxu0
    %v588 = vadd.f32 0.0, %v587
    %589 = vmatmul.f32.gmra.mxu0 %v262
    %v590 = vpop.f32.mrf.mxu0
    %v591 = vadd.f32 0.0, %v590
    %592 = vdwg.mxu0
    %593 = vmatpush.msra.mxu0 %v331
    %594 = vmatpush.msra.mxu0 %v329
    %595 = vmatpush.msra.mxu0 %v327
    %596 = vmatpush.msra.mxu0 %v325
    %597 = vmatpush.msra.mxu0 %v323
    %598 = vmatpush.msra.mxu0 %v321
    %599 = vmatpush.msra.mxu0 %v319
    %600 = vmatpush.msra.mxu0 %v317
    %601 = vmatpush.msra.mxu0 %v315
    %602 = vmatpush.msra.mxu0 %v313
    %603 = vmatpush.msra.mxu0 %v311
    %604 = vmatpush.msra.mxu0 %v309
    %605 = vmatpush.msra.mxu0 %v307
    %606 = vmatpush.msra.mxu0 %v305
    %607 = vmatpush.msra.mxu0 %v303
    %608 = vmatpush.msra.mxu0 %v301
    %609 = vmatmul.f32.gmra.mxu0 %v151
    %v610 = vpop.f32.mrf.mxu0
    %v611 = vadd.f32 %v543, %v610
    %612 = vmatmul.f32.gmra.mxu0 %v158
    %v613 = vpop.f32.mrf.mxu0
    %v614 = vadd.f32 %v546, %v613
    %615 = vmatmul.f32.gmra.mxu0 %v165
    %v616 = vpop.f32.mrf.mxu0
    %v617 = vadd.f32 %v549, %v616
    %618 = vmatmul.f32.gmra.mxu0 %v172
    %v619 = vpop.f32.mrf.mxu0
    %v620 = vadd.f32 %v552, %v619
    %621 = vmatmul.f32.gmra.mxu0 %v179
    %v622 = vpop.f32.mrf.mxu0
    %v623 = vadd.f32 %v555, %v622
    %624 = vmatmul.f32.gmra.mxu0 %v186
    %v625 = vpop.f32.mrf.mxu0
    %v626 = vadd.f32 %v558, %v625
    %627 = vmatmul.f32.gmra.mxu0 %v193
    %v628 = vpop.f32.mrf.mxu0
    %v629 = vadd.f32 %v561, %v628
    %630 = vmatmul.f32.gmra.mxu0 %v200
    %v631 = vpop.f32.mrf.mxu0
    %v632 = vadd.f32 %v564, %v631
    %633 = vmatmul.f32.gmra.mxu0 %v207
    %v634 = vpop.f32.mrf.mxu0
    %v635 = vadd.f32 %v567, %v634
    %636 = vmatmul.f32.gmra.mxu0 %v214
    %v637 = vpop.f32.mrf.mxu0
    %v638 = vadd.f32 %v570, %v637
    %639 = vmatmul.f32.gmra.mxu0 %v221
    %v640 = vpop.f32.mrf.mxu0
    %v641 = vadd.f32 %v573, %v640
    %642 = vmatmul.f32.gmra.mxu0 %v228
    %v643 = vpop.f32.mrf.mxu0
    %v644 = vadd.f32 %v576, %v643
    %645 = vmatmul.f32.gmra.mxu0 %v235
    %v646 = vpop.f32.mrf.mxu0
    %v647 = vadd.f32 %v579, %v646
    %648 = vmatmul.f32.gmra.mxu0 %v242
    %v649 = vpop.f32.mrf.mxu0
    %v650 = vadd.f32 %v582, %v649
    %651 = vmatmul.f32.gmra.mxu0 %v249
    %v652 = vpop.f32.mrf.mxu0
    %v653 = vadd.f32 %v585, %v652
    %654 = vmatmul.f32.gmra.mxu0 %v256
    %v655 = vpop.f32.mrf.mxu0
    %v656 = vadd.f32 %v588, %v655
    %657 = vmatmul.f32.gmra.mxu0 %v263
    %v658 = vpop.f32.mrf.mxu0
    %v659 = vadd.f32 %v591, %v658
    %660 = vdwg.mxu0
    %661 = vmatpush.msra.mxu0 %v363
    %662 = vmatpush.msra.mxu0 %v361
    %663 = vmatpush.msra.mxu0 %v359
    %664 = vmatpush.msra.mxu0 %v357
    %665 = vmatpush.msra.mxu0 %v355
    %666 = vmatpush.msra.mxu0 %v353
    %667 = vmatpush.msra.mxu0 %v351
    %668 = vmatpush.msra.mxu0 %v349
    %669 = vmatpush.msra.mxu0 %v347
    %670 = vmatpush.msra.mxu0 %v345
    %671 = vmatpush.msra.mxu0 %v343
    %672 = vmatpush.msra.mxu0 %v341
    %673 = vmatpush.msra.mxu0 %v339
    %674 = vmatpush.msra.mxu0 %v337
    %675 = vmatpush.msra.mxu0 %v335
    %676 = vmatpush.msra.mxu0 %v333
    %677 = vmatmul.f32.gmra.mxu0 %v152
    %v678 = vpop.f32.mrf.mxu0
    %v679 = vadd.f32 %v611, %v678
    %680 = vmatmul.f32.gmra.mxu0 %v159
    %v681 = vpop.f32.mrf.mxu0
    %v682 = vadd.f32 %v614, %v681
    %683 = vmatmul.f32.gmra.mxu0 %v166
    %v684 = vpop.f32.mrf.mxu0
    %v685 = vadd.f32 %v617, %v684
    %686 = vmatmul.f32.gmra.mxu0 %v173
    %v687 = vpop.f32.mrf.mxu0
    %v688 = vadd.f32 %v620, %v687
    %689 = vmatmul.f32.gmra.mxu0 %v180
    %v690 = vpop.f32.mrf.mxu0
    %v691 = vadd.f32 %v623, %v690
    %692 = vmatmul.f32.gmra.mxu0 %v187
    %v693 = vpop.f32.mrf.mxu0
    %v694 = vadd.f32 %v626, %v693
    %695 = vmatmul.f32.gmra.mxu0 %v194
    %v696 = vpop.f32.mrf.mxu0
    %v697 = vadd.f32 %v629, %v696
    %698 = vmatmul.f32.gmra.mxu0 %v201
    %v699 = vpop.f32.mrf.mxu0
    %v700 = vadd.f32 %v632, %v699
    %701 = vmatmul.f32.gmra.mxu0 %v208
    %v702 = vpop.f32.mrf.mxu0
    %v703 = vadd.f32 %v635, %v702
    %704 = vmatmul.f32.gmra.mxu0 %v215
    %v705 = vpop.f32.mrf.mxu0
    %v706 = vadd.f32 %v638, %v705
    %707 = vmatmul.f32.gmra.mxu0 %v222
    %v708 = vpop.f32.mrf.mxu0
    %v709 = vadd.f32 %v641, %v708
    %710 = vmatmul.f32.gmra.mxu0 %v229
    %v711 = vpop.f32.mrf.mxu0
    %v712 = vadd.f32 %v644, %v711
    %713 = vmatmul.f32.gmra.mxu0 %v236
    %v714 = vpop.f32.mrf.mxu0
    %v715 = vadd.f32 %v647, %v714
    %716 = vmatmul.f32.gmra.mxu0 %v243
    %v717 = vpop.f32.mrf.mxu0
    %v718 = vadd.f32 %v650, %v717
    %719 = vmatmul.f32.gmra.mxu0 %v250
    %v720 = vpop.f32.mrf.mxu0
    %v721 = vadd.f32 %v653, %v720
    %722 = vmatmul.f32.gmra.mxu0 %v257
    %v723 = vpop.f32.mrf.mxu0
    %v724 = vadd.f32 %v656, %v723
    %725 = vmatmul.f32.gmra.mxu0 %v264
    %v726 = vpop.f32.mrf.mxu0
    %v727 = vadd.f32 %v659, %v726
    %728 = vdwg.mxu0
    %729 = vmatpush.msra.mxu0 %v395
    %730 = vmatpush.msra.mxu0 %v393
    %731 = vmatpush.msra.mxu0 %v391
    %732 = vmatpush.msra.mxu0 %v389
    %733 = vmatpush.msra.mxu0 %v387
    %734 = vmatpush.msra.mxu0 %v385
    %735 = vmatpush.msra.mxu0 %v383
    %736 = vmatpush.msra.mxu0 %v381
    %737 = vmatpush.msra.mxu0 %v379
    %738 = vmatpush.msra.mxu0 %v377
    %739 = vmatpush.msra.mxu0 %v375
    %740 = vmatpush.msra.mxu0 %v373
    %741 = vmatpush.msra.mxu0 %v371
    %742 = vmatpush.msra.mxu0 %v369
    %743 = vmatpush.msra.mxu0 %v367
    %744 = vmatpush.msra.mxu0 %v365
    %745 = vmatmul.f32.gmra.mxu0 %v153
    %v746 = vpop.f32.mrf.mxu0
    %v747 = vadd.f32 %v679, %v746
    %748 = vmatmul.f32.gmra.mxu0 %v160
    %v749 = vpop.f32.mrf.mxu0
    %v750 = vadd.f32 %v682, %v749
    %751 = vmatmul.f32.gmra.mxu0 %v167
    %v752 = vpop.f32.mrf.mxu0
    %v753 = vadd.f32 %v685, %v752
    %754 = vmatmul.f32.gmra.mxu0 %v174
    %v755 = vpop.f32.mrf.mxu0
    %v756 = vadd.f32 %v688, %v755
    %757 = vmatmul.f32.gmra.mxu0 %v181
    %v758 = vpop.f32.mrf.mxu0
    %v759 = vadd.f32 %v691, %v758
    %760 = vmatmul.f32.gmra.mxu0 %v188
    %v761 = vpop.f32.mrf.mxu0
    %v762 = vadd.f32 %v694, %v761
    %763 = vmatmul.f32.gmra.mxu0 %v195
    %v764 = vpop.f32.mrf.mxu0
    %v765 = vadd.f32 %v697, %v764
    %766 = vmatmul.f32.gmra.mxu0 %v202
    %v767 = vpop.f32.mrf.mxu0
    %v768 = vadd.f32 %v700, %v767
    %769 = vmatmul.f32.gmra.mxu0 %v209
    %v770 = vpop.f32.mrf.mxu0
    %v771 = vadd.f32 %v703, %v770
    %772 = vmatmul.f32.gmra.mxu0 %v216
    %v773 = vpop.f32.mrf.mxu0
    %v774 = vadd.f32 %v706, %v773
    %775 = vmatmul.f32.gmra.mxu0 %v223
    %v776 = vpop.f32.mrf.mxu0
    %v777 = vadd.f32 %v709, %v776
    %778 = vmatmul.f32.gmra.mxu0 %v230
    %v779 = vpop.f32.mrf.mxu0
    %v780 = vadd.f32 %v712, %v779
    %781 = vmatmul.f32.gmra.mxu0 %v237
    %v782 = vpop.f32.mrf.mxu0
    %v783 = vadd.f32 %v715, %v782
    %784 = vmatmul.f32.gmra.mxu0 %v244
    %v785 = vpop.f32.mrf.mxu0
    %v786 = vadd.f32 %v718, %v785
    %787 = vmatmul.f32.gmra.mxu0 %v251
    %v788 = vpop.f32.mrf.mxu0
    %v789 = vadd.f32 %v721, %v788
    %790 = vmatmul.f32.gmra.mxu0 %v258
    %v791 = vpop.f32.mrf.mxu0
    %v792 = vadd.f32 %v724, %v791
    %793 = vmatmul.f32.gmra.mxu0 %v265
    %v794 = vpop.f32.mrf.mxu0
    %v795 = vadd.f32 %v727, %v794
    %796 = vdwg.mxu0
    %797 = vmatpush.msra.mxu0 %v427
    %798 = vmatpush.msra.mxu0 %v425
    %799 = vmatpush.msra.mxu0 %v423
    %800 = vmatpush.msra.mxu0 %v421
    %801 = vmatpush.msra.mxu0 %v419
    %802 = vmatpush.msra.mxu0 %v417
    %803 = vmatpush.msra.mxu0 %v415
    %804 = vmatpush.msra.mxu0 %v413
    %805 = vmatpush.msra.mxu0 %v411
    %806 = vmatpush.msra.mxu0 %v409
    %807 = vmatpush.msra.mxu0 %v407
    %808 = vmatpush.msra.mxu0 %v405
    %809 = vmatpush.msra.mxu0 %v403
    %810 = vmatpush.msra.mxu0 %v401
    %811 = vmatpush.msra.mxu0 %v399
    %812 = vmatpush.msra.mxu0 %v397
    %813 = vmatmul.f32.gmra.mxu0 %v154
    %v814 = vpop.f32.mrf.mxu0
    %v815 = vadd.f32 %v747, %v814
    %816 = vmatmul.f32.gmra.mxu0 %v161
    %v817 = vpop.f32.mrf.mxu0
    %v818 = vadd.f32 %v750, %v817
    %819 = vmatmul.f32.gmra.mxu0 %v168
    %v820 = vpop.f32.mrf.mxu0
    %v821 = vadd.f32 %v753, %v820
    %822 = vmatmul.f32.gmra.mxu0 %v175
    %v823 = vpop.f32.mrf.mxu0
    %v824 = vadd.f32 %v756, %v823
    %825 = vmatmul.f32.gmra.mxu0 %v182
    %v826 = vpop.f32.mrf.mxu0
    %v827 = vadd.f32 %v759, %v826
    %828 = vmatmul.f32.gmra.mxu0 %v189
    %v829 = vpop.f32.mrf.mxu0
    %v830 = vadd.f32 %v762, %v829
    %831 = vmatmul.f32.gmra.mxu0 %v196
    %v832 = vpop.f32.mrf.mxu0
    %v833 = vadd.f32 %v765, %v832
    %834 = vmatmul.f32.gmra.mxu0 %v203
    %v835 = vpop.f32.mrf.mxu0
    %v836 = vadd.f32 %v768, %v835
    %837 = vmatmul.f32.gmra.mxu0 %v210
    %v838 = vpop.f32.mrf.mxu0
    %v839 = vadd.f32 %v771, %v838
    %840 = vmatmul.f32.gmra.mxu0 %v217
    %v841 = vpop.f32.mrf.mxu0
    %v842 = vadd.f32 %v774, %v841
    %843 = vmatmul.f32.gmra.mxu0 %v224
    %v844 = vpop.f32.mrf.mxu0
    %v845 = vadd.f32 %v777, %v844
    %846 = vmatmul.f32.gmra.mxu0 %v231
    %v847 = vpop.f32.mrf.mxu0
    %v848 = vadd.f32 %v780, %v847
    %849 = vmatmul.f32.gmra.mxu0 %v238
    %v850 = vpop.f32.mrf.mxu0
    %v851 = vadd.f32 %v783, %v850
    %852 = vmatmul.f32.gmra.mxu0 %v245
    %v853 = vpop.f32.mrf.mxu0
    %v854 = vadd.f32 %v786, %v853
    %855 = vmatmul.f32.gmra.mxu0 %v252
    %v856 = vpop.f32.mrf.mxu0
    %v857 = vadd.f32 %v789, %v856
    %858 = vmatmul.f32.gmra.mxu0 %v259
    %v859 = vpop.f32.mrf.mxu0
    %v860 = vadd.f32 %v792, %v859
    %861 = vmatmul.f32.gmra.mxu0 %v266
    %v862 = vpop.f32.mrf.mxu0
    %v863 = vadd.f32 %v795, %v862
    %864 = vdwg.mxu0
    %865 = vmatpush.msra.mxu0 %v459
    %866 = vmatpush.msra.mxu0 %v457
    %867 = vmatpush.msra.mxu0 %v455
    %868 = vmatpush.msra.mxu0 %v453
    %869 = vmatpush.msra.mxu0 %v451
    %870 = vmatpush.msra.mxu0 %v449
    %871 = vmatpush.msra.mxu0 %v447
    %872 = vmatpush.msra.mxu0 %v445
    %873 = vmatpush.msra.mxu0 %v443
    %874 = vmatpush.msra.mxu0 %v441
    %875 = vmatpush.msra.mxu0 %v439
    %876 = vmatpush.msra.mxu0 %v437
    %877 = vmatpush.msra.mxu0 %v435
    %878 = vmatpush.msra.mxu0 %v433
    %879 = vmatpush.msra.mxu0 %v431
    %880 = vmatpush.msra.mxu0 %v429
    %881 = vmatmul.f32.gmra.mxu0 %v155
    %v882 = vpop.f32.mrf.mxu0
    %v883 = vadd.f32 %v815, %v882
    %884 = vmatmul.f32.gmra.mxu0 %v162
    %v885 = vpop.f32.mrf.mxu0
    %v886 = vadd.f32 %v818, %v885
    %887 = vmatmul.f32.gmra.mxu0 %v169
    %v888 = vpop.f32.mrf.mxu0
    %v889 = vadd.f32 %v821, %v888
    %890 = vmatmul.f32.gmra.mxu0 %v176
    %v891 = vpop.f32.mrf.mxu0
    %v892 = vadd.f32 %v824, %v891
    %893 = vmatmul.f32.gmra.mxu0 %v183
    %v894 = vpop.f32.mrf.mxu0
    %v895 = vadd.f32 %v827, %v894
    %896 = vmatmul.f32.gmra.mxu0 %v190
    %v897 = vpop.f32.mrf.mxu0
    %v898 = vadd.f32 %v830, %v897
    %899 = vmatmul.f32.gmra.mxu0 %v197
    %v900 = vpop.f32.mrf.mxu0
    %v901 = vadd.f32 %v833, %v900
    %902 = vmatmul.f32.gmra.mxu0 %v204
    %v903 = vpop.f32.mrf.mxu0
    %v904 = vadd.f32 %v836, %v903
    %905 = vmatmul.f32.gmra.mxu0 %v211
    %v906 = vpop.f32.mrf.mxu0
    %v907 = vadd.f32 %v839, %v906
    %908 = vmatmul.f32.gmra.mxu0 %v218
    %v909 = vpop.f32.mrf.mxu0
    %v910 = vadd.f32 %v842, %v909
    %911 = vmatmul.f32.gmra.mxu0 %v225
    %v912 = vpop.f32.mrf.mxu0
    %v913 = vadd.f32 %v845, %v912
    %914 = vmatmul.f32.gmra.mxu0 %v232
    %v915 = vpop.f32.mrf.mxu0
    %v916 = vadd.f32 %v848, %v915
    %917 = vmatmul.f32.gmra.mxu0 %v239
    %v918 = vpop.f32.mrf.mxu0
    %v919 = vadd.f32 %v851, %v918
    %920 = vmatmul.f32.gmra.mxu0 %v246
    %v921 = vpop.f32.mrf.mxu0
    %v922 = vadd.f32 %v854, %v921
    %923 = vmatmul.f32.gmra.mxu0 %v253
    %v924 = vpop.f32.mrf.mxu0
    %v925 = vadd.f32 %v857, %v924
    %926 = vmatmul.f32.gmra.mxu0 %v260
    %v927 = vpop.f32.mrf.mxu0
    %v928 = vadd.f32 %v860, %v927
    %929 = vmatmul.f32.gmra.mxu0 %v267
    %v930 = vpop.f32.mrf.mxu0
    %v931 = vadd.f32 %v863, %v930
    %932 = vdwg.mxu0
    %933 = vmatpush.msra.mxu0 0.0
    %934 = vmatpush.msra.mxu0 0.0
    %935 = vmatpush.msra.mxu0 0.0
    %936 = vmatpush.msra.mxu0 0.0
    %937 = vmatpush.msra.mxu0 0.0
    %938 = vmatpush.msra.mxu0 0.0
    %939 = vmatpush.msra.mxu0 0.0
    %940 = vmatpush.msra.mxu0 0.0
    %941 = vmatpush.msra.mxu0 0.0
    %942 = vmatpush.msra.mxu0 0.0
    %943 = vmatpush.msra.mxu0 %v471
    %944 = vmatpush.msra.mxu0 %v469
    %945 = vmatpush.msra.mxu0 %v467
    %946 = vmatpush.msra.mxu0 %v465
    %947 = vmatpush.msra.mxu0 %v463
    %948 = vmatpush.msra.mxu0 %v461
    %949 = vmatmul.f32.gmra.mxu0 %v475
    %v950 = vpop.f32.mrf.mxu0
    %v951 = vadd.f32 %v883, %v950
    %952 = vmatmul.f32.gmra.mxu0 %v478
    %v953 = vpop.f32.mrf.mxu0
    %v954 = vadd.f32 %v886, %v953
    %955 = vmatmul.f32.gmra.mxu0 %v481
    %v956 = vpop.f32.mrf.mxu0
    %v957 = vadd.f32 %v889, %v956
    %958 = vmatmul.f32.gmra.mxu0 %v484
    %v959 = vpop.f32.mrf.mxu0
    %v960 = vadd.f32 %v892, %v959
    %961 = vmatmul.f32.gmra.mxu0 %v487
    %v962 = vpop.f32.mrf.mxu0
    %v963 = vadd.f32 %v895, %v962
    %964 = vmatmul.f32.gmra.mxu0 %v490
    %v965 = vpop.f32.mrf.mxu0
    %v966 = vadd.f32 %v898, %v965
    %967 = vmatmul.f32.gmra.mxu0 %v493
    %v968 = vpop.f32.mrf.mxu0
    %v969 = vadd.f32 %v901, %v968
    %970 = vmatmul.f32.gmra.mxu0 %v496
    %v971 = vpop.f32.mrf.mxu0
    %v972 = vadd.f32 %v904, %v971
    %973 = vmatmul.f32.gmra.mxu0 %v499
    %v974 = vpop.f32.mrf.mxu0
    %v975 = vadd.f32 %v907, %v974
    %976 = vmatmul.f32.gmra.mxu0 %v502
    %v977 = vpop.f32.mrf.mxu0
    %v978 = vadd.f32 %v910, %v977
    %979 = vmatmul.f32.gmra.mxu0 %v505
    %v980 = vpop.f32.mrf.mxu0
    %v981 = vadd.f32 %v913, %v980
    %982 = vmatmul.f32.gmra.mxu0 %v508
    %v983 = vpop.f32.mrf.mxu0
    %v984 = vadd.f32 %v916, %v983
    %985 = vmatmul.f32.gmra.mxu0 %v511
    %v986 = vpop.f32.mrf.mxu0
    %v987 = vadd.f32 %v919, %v986
    %988 = vmatmul.f32.gmra.mxu0 %v514
    %v989 = vpop.f32.mrf.mxu0
    %v990 = vadd.f32 %v922, %v989
    %991 = vmatmul.f32.gmra.mxu0 %v517
    %v992 = vpop.f32.mrf.mxu0
    %v993 = vadd.f32 %v925, %v992
    %994 = vmatmul.f32.gmra.mxu0 %v520
    %v995 = vpop.f32.mrf.mxu0
    %v996 = vadd.f32 %v928, %v995
    %997 = vmatmul.f32.gmra.mxu0 %v523
    %v998 = vpop.f32.mrf.mxu0
    %v999 = vadd.f32 %v931, %v998
    %1000 = vdwg.mxu0
    %1001 = vmatpush.msra.mxu0 %v300
    %1002 = vmatpush.msra.mxu0 %v298
    %1003 = vmatpush.msra.mxu0 %v296
    %1004 = vmatpush.msra.mxu0 %v294
    %1005 = vmatpush.msra.mxu0 %v292
    %1006 = vmatpush.msra.mxu0 %v290
    %1007 = vmatpush.msra.mxu0 %v288
    %1008 = vmatpush.msra.mxu0 %v286
    %1009 = vmatpush.msra.mxu0 %v284
    %1010 = vmatpush.msra.mxu0 %v282
    %1011 = vmatpush.msra.mxu0 %v280
    %1012 = vmatpush.msra.mxu0 %v278
    %1013 = vmatpush.msra.mxu0 %v276
    %1014 = vmatpush.msra.mxu0 %v274
    %1015 = vmatpush.msra.mxu0 %v272
    %1016 = vmatpush.msra.mxu0 %v270
    %1017 = vmatmul.f32.gmra.mxu0 %v150
    %v1018 = vpop.f32.mrf.mxu0
    %v1019 = vadd.f32 0.0, %v1018
    %1020 = vmatmul.f32.gmra.mxu0 %v157
    %v1021 = vpop.f32.mrf.mxu0
    %v1022 = vadd.f32 0.0, %v1021
    %1023 = vmatmul.f32.gmra.mxu0 %v164
    %v1024 = vpop.f32.mrf.mxu0
    %v1025 = vadd.f32 0.0, %v1024
    %1026 = vmatmul.f32.gmra.mxu0 %v171
    %v1027 = vpop.f32.mrf.mxu0
    %v1028 = vadd.f32 0.0, %v1027
    %1029 = vmatmul.f32.gmra.mxu0 %v178
    %v1030 = vpop.f32.mrf.mxu0
    %v1031 = vadd.f32 0.0, %v1030
    %1032 = vmatmul.f32.gmra.mxu0 %v185
    %v1033 = vpop.f32.mrf.mxu0
    %v1034 = vadd.f32 0.0, %v1033
    %1035 = vmatmul.f32.gmra.mxu0 %v192
    %v1036 = vpop.f32.mrf.mxu0
    %v1037 = vadd.f32 0.0, %v1036
    %1038 = vmatmul.f32.gmra.mxu0 %v199
    %v1039 = vpop.f32.mrf.mxu0
    %v1040 = vadd.f32 0.0, %v1039
    %1041 = vmatmul.f32.gmra.mxu0 %v206
    %v1042 = vpop.f32.mrf.mxu0
    %v1043 = vadd.f32 0.0, %v1042
    %1044 = vmatmul.f32.gmra.mxu0 %v213
    %v1045 = vpop.f32.mrf.mxu0
    %v1046 = vadd.f32 0.0, %v1045
    %1047 = vmatmul.f32.gmra.mxu0 %v220
    %v1048 = vpop.f32.mrf.mxu0
    %v1049 = vadd.f32 0.0, %v1048
    %1050 = vmatmul.f32.gmra.mxu0 %v227
    %v1051 = vpop.f32.mrf.mxu0
    %v1052 = vadd.f32 0.0, %v1051
    %1053 = vmatmul.f32.gmra.mxu0 %v234
    %v1054 = vpop.f32.mrf.mxu0
    %v1055 = vadd.f32 0.0, %v1054
    %1056 = vmatmul.f32.gmra.mxu0 %v241
    %v1057 = vpop.f32.mrf.mxu0
    %v1058 = vadd.f32 0.0, %v1057
    %1059 = vmatmul.f32.gmra.mxu0 %v248
    %v1060 = vpop.f32.mrf.mxu0
    %v1061 = vadd.f32 0.0, %v1060
    %1062 = vmatmul.f32.gmra.mxu0 %v255
    %v1063 = vpop.f32.mrf.mxu0
    %v1064 = vadd.f32 0.0, %v1063
    %1065 = vmatmul.f32.gmra.mxu0 %v262
    %v1066 = vpop.f32.mrf.mxu0
    %v1067 = vadd.f32 0.0, %v1066
    %1068 = vdwg.mxu0
    %1069 = vmatpush.msra.mxu0 %v332
    %1070 = vmatpush.msra.mxu0 %v330
    %1071 = vmatpush.msra.mxu0 %v328
    %1072 = vmatpush.msra.mxu0 %v326
    %1073 = vmatpush.msra.mxu0 %v324
    %1074 = vmatpush.msra.mxu0 %v322
    %1075 = vmatpush.msra.mxu0 %v320
    %1076 = vmatpush.msra.mxu0 %v318
    %1077 = vmatpush.msra.mxu0 %v316
    %1078 = vmatpush.msra.mxu0 %v314
    %1079 = vmatpush.msra.mxu0 %v312
    %1080 = vmatpush.msra.mxu0 %v310
    %1081 = vmatpush.msra.mxu0 %v308
    %1082 = vmatpush.msra.mxu0 %v306
    %1083 = vmatpush.msra.mxu0 %v304
    %1084 = vmatpush.msra.mxu0 %v302
    %1085 = vmatmul.f32.gmra.mxu0 %v151
    %v1086 = vpop.f32.mrf.mxu0
    %v1087 = vadd.f32 %v1019, %v1086
    %1088 = vmatmul.f32.gmra.mxu0 %v158
    %v1089 = vpop.f32.mrf.mxu0
    %v1090 = vadd.f32 %v1022, %v1089
    %1091 = vmatmul.f32.gmra.mxu0 %v165
    %v1092 = vpop.f32.mrf.mxu0
    %v1093 = vadd.f32 %v1025, %v1092
    %1094 = vmatmul.f32.gmra.mxu0 %v172
    %v1095 = vpop.f32.mrf.mxu0
    %v1096 = vadd.f32 %v1028, %v1095
    %1097 = vmatmul.f32.gmra.mxu0 %v179
    %v1098 = vpop.f32.mrf.mxu0
    %v1099 = vadd.f32 %v1031, %v1098
    %1100 = vmatmul.f32.gmra.mxu0 %v186
    %v1101 = vpop.f32.mrf.mxu0
    %v1102 = vadd.f32 %v1034, %v1101
    %1103 = vmatmul.f32.gmra.mxu0 %v193
    %v1104 = vpop.f32.mrf.mxu0
    %v1105 = vadd.f32 %v1037, %v1104
    %1106 = vmatmul.f32.gmra.mxu0 %v200
    %v1107 = vpop.f32.mrf.mxu0
    %v1108 = vadd.f32 %v1040, %v1107
    %1109 = vmatmul.f32.gmra.mxu0 %v207
    %v1110 = vpop.f32.mrf.mxu0
    %v1111 = vadd.f32 %v1043, %v1110
    %1112 = vmatmul.f32.gmra.mxu0 %v214
    %v1113 = vpop.f32.mrf.mxu0
    %v1114 = vadd.f32 %v1046, %v1113
    %1115 = vmatmul.f32.gmra.mxu0 %v221
    %v1116 = vpop.f32.mrf.mxu0
    %v1117 = vadd.f32 %v1049, %v1116
    %1118 = vmatmul.f32.gmra.mxu0 %v228
    %v1119 = vpop.f32.mrf.mxu0
    %v1120 = vadd.f32 %v1052, %v1119
    %1121 = vmatmul.f32.gmra.mxu0 %v235
    %v1122 = vpop.f32.mrf.mxu0
    %v1123 = vadd.f32 %v1055, %v1122
    %1124 = vmatmul.f32.gmra.mxu0 %v242
    %v1125 = vpop.f32.mrf.mxu0
    %v1126 = vadd.f32 %v1058, %v1125
    %1127 = vmatmul.f32.gmra.mxu0 %v249
    %v1128 = vpop.f32.mrf.mxu0
    %v1129 = vadd.f32 %v1061, %v1128
    %1130 = vmatmul.f32.gmra.mxu0 %v256
    %v1131 = vpop.f32.mrf.mxu0
    %v1132 = vadd.f32 %v1064, %v1131
    %1133 = vmatmul.f32.gmra.mxu0 %v263
    %v1134 = vpop.f32.mrf.mxu0
    %v1135 = vadd.f32 %v1067, %v1134
    %1136 = vdwg.mxu0
    %1137 = vmatpush.msra.mxu0 %v364
    %1138 = vmatpush.msra.mxu0 %v362
    %1139 = vmatpush.msra.mxu0 %v360
    %1140 = vmatpush.msra.mxu0 %v358
    %1141 = vmatpush.msra.mxu0 %v356
    %1142 = vmatpush.msra.mxu0 %v354
    %1143 = vmatpush.msra.mxu0 %v352
    %1144 = vmatpush.msra.mxu0 %v350
    %1145 = vmatpush.msra.mxu0 %v348
    %1146 = vmatpush.msra.mxu0 %v346
    %1147 = vmatpush.msra.mxu0 %v344
    %1148 = vmatpush.msra.mxu0 %v342
    %1149 = vmatpush.msra.mxu0 %v340
    %1150 = vmatpush.msra.mxu0 %v338
    %1151 = vmatpush.msra.mxu0 %v336
    %1152 = vmatpush.msra.mxu0 %v334
    %1153 = vmatmul.f32.gmra.mxu0 %v152
    %v1154 = vpop.f32.mrf.mxu0
    %v1155 = vadd.f32 %v1087, %v1154
    %1156 = vmatmul.f32.gmra.mxu0 %v159
    %v1157 = vpop.f32.mrf.mxu0
    %v1158 = vadd.f32 %v1090, %v1157
    %1159 = vmatmul.f32.gmra.mxu0 %v166
    %v1160 = vpop.f32.mrf.mxu0
    %v1161 = vadd.f32 %v1093, %v1160
    %1162 = vmatmul.f32.gmra.mxu0 %v173
    %v1163 = vpop.f32.mrf.mxu0
    %v1164 = vadd.f32 %v1096, %v1163
    %1165 = vmatmul.f32.gmra.mxu0 %v180
    %v1166 = vpop.f32.mrf.mxu0
    %v1167 = vadd.f32 %v1099, %v1166
    %1168 = vmatmul.f32.gmra.mxu0 %v187
    %v1169 = vpop.f32.mrf.mxu0
    %v1170 = vadd.f32 %v1102, %v1169
    %1171 = vmatmul.f32.gmra.mxu0 %v194
    %v1172 = vpop.f32.mrf.mxu0
    %v1173 = vadd.f32 %v1105, %v1172
    %1174 = vmatmul.f32.gmra.mxu0 %v201
    %v1175 = vpop.f32.mrf.mxu0
    %v1176 = vadd.f32 %v1108, %v1175
    %1177 = vmatmul.f32.gmra.mxu0 %v208
    %v1178 = vpop.f32.mrf.mxu0
    %v1179 = vadd.f32 %v1111, %v1178
    %1180 = vmatmul.f32.gmra.mxu0 %v215
    %v1181 = vpop.f32.mrf.mxu0
    %v1182 = vadd.f32 %v1114, %v1181
    %1183 = vmatmul.f32.gmra.mxu0 %v222
    %v1184 = vpop.f32.mrf.mxu0
    %v1185 = vadd.f32 %v1117, %v1184
    %1186 = vmatmul.f32.gmra.mxu0 %v229
    %v1187 = vpop.f32.mrf.mxu0
    %v1188 = vadd.f32 %v1120, %v1187
    %1189 = vmatmul.f32.gmra.mxu0 %v236
    %v1190 = vpop.f32.mrf.mxu0
    %v1191 = vadd.f32 %v1123, %v1190
    %1192 = vmatmul.f32.gmra.mxu0 %v243
    %v1193 = vpop.f32.mrf.mxu0
    %v1194 = vadd.f32 %v1126, %v1193
    %1195 = vmatmul.f32.gmra.mxu0 %v250
    %v1196 = vpop.f32.mrf.mxu0
    %v1197 = vadd.f32 %v1129, %v1196
    %1198 = vmatmul.f32.gmra.mxu0 %v257
    %v1199 = vpop.f32.mrf.mxu0
    %v1200 = vadd.f32 %v1132, %v1199
    %1201 = vmatmul.f32.gmra.mxu0 %v264
    %v1202 = vpop.f32.mrf.mxu0
    %v1203 = vadd.f32 %v1135, %v1202
    %1204 = vdwg.mxu0
    %1205 = vmatpush.msra.mxu0 %v396
    %1206 = vmatpush.msra.mxu0 %v394
    %1207 = vmatpush.msra.mxu0 %v392
    %1208 = vmatpush.msra.mxu0 %v390
    %1209 = vmatpush.msra.mxu0 %v388
    %1210 = vmatpush.msra.mxu0 %v386
    %1211 = vmatpush.msra.mxu0 %v384
    %1212 = vmatpush.msra.mxu0 %v382
    %1213 = vmatpush.msra.mxu0 %v380
    %1214 = vmatpush.msra.mxu0 %v378
    %1215 = vmatpush.msra.mxu0 %v376
    %1216 = vmatpush.msra.mxu0 %v374
    %1217 = vmatpush.msra.mxu0 %v372
    %1218 = vmatpush.msra.mxu0 %v370
    %1219 = vmatpush.msra.mxu0 %v368
    %1220 = vmatpush.msra.mxu0 %v366
    %1221 = vmatmul.f32.gmra.mxu0 %v153
    %v1222 = vpop.f32.mrf.mxu0
    %v1223 = vadd.f32 %v1155, %v1222
    %1224 = vmatmul.f32.gmra.mxu0 %v160
    %v1225 = vpop.f32.mrf.mxu0
    %v1226 = vadd.f32 %v1158, %v1225
    %1227 = vmatmul.f32.gmra.mxu0 %v167
    %v1228 = vpop.f32.mrf.mxu0
    %v1229 = vadd.f32 %v1161, %v1228
    %1230 = vmatmul.f32.gmra.mxu0 %v174
    %v1231 = vpop.f32.mrf.mxu0
    %v1232 = vadd.f32 %v1164, %v1231
    %1233 = vmatmul.f32.gmra.mxu0 %v181
    %v1234 = vpop.f32.mrf.mxu0
    %v1235 = vadd.f32 %v1167, %v1234
    %1236 = vmatmul.f32.gmra.mxu0 %v188
    %v1237 = vpop.f32.mrf.mxu0
    %v1238 = vadd.f32 %v1170, %v1237
    %1239 = vmatmul.f32.gmra.mxu0 %v195
    %v1240 = vpop.f32.mrf.mxu0
    %v1241 = vadd.f32 %v1173, %v1240
    %1242 = vmatmul.f32.gmra.mxu0 %v202
    %v1243 = vpop.f32.mrf.mxu0
    %v1244 = vadd.f32 %v1176, %v1243
    %1245 = vmatmul.f32.gmra.mxu0 %v209
    %v1246 = vpop.f32.mrf.mxu0
    %v1247 = vadd.f32 %v1179, %v1246
    %1248 = vmatmul.f32.gmra.mxu0 %v216
    %v1249 = vpop.f32.mrf.mxu0
    %v1250 = vadd.f32 %v1182, %v1249
    %1251 = vmatmul.f32.gmra.mxu0 %v223
    %v1252 = vpop.f32.mrf.mxu0
    %v1253 = vadd.f32 %v1185, %v1252
    %1254 = vmatmul.f32.gmra.mxu0 %v230
    %v1255 = vpop.f32.mrf.mxu0
    %v1256 = vadd.f32 %v1188, %v1255
    %1257 = vmatmul.f32.gmra.mxu0 %v237
    %v1258 = vpop.f32.mrf.mxu0
    %v1259 = vadd.f32 %v1191, %v1258
    %1260 = vmatmul.f32.gmra.mxu0 %v244
    %v1261 = vpop.f32.mrf.mxu0
    %v1262 = vadd.f32 %v1194, %v1261
    %1263 = vmatmul.f32.gmra.mxu0 %v251
    %v1264 = vpop.f32.mrf.mxu0
    %v1265 = vadd.f32 %v1197, %v1264
    %1266 = vmatmul.f32.gmra.mxu0 %v258
    %v1267 = vpop.f32.mrf.mxu0
    %v1268 = vadd.f32 %v1200, %v1267
    %1269 = vmatmul.f32.gmra.mxu0 %v265
    %v1270 = vpop.f32.mrf.mxu0
    %v1271 = vadd.f32 %v1203, %v1270
    %1272 = vdwg.mxu0
    %1273 = vmatpush.msra.mxu0 %v428
    %1274 = vmatpush.msra.mxu0 %v426
    %1275 = vmatpush.msra.mxu0 %v424
    %1276 = vmatpush.msra.mxu0 %v422
    %1277 = vmatpush.msra.mxu0 %v420
    %1278 = vmatpush.msra.mxu0 %v418
    %1279 = vmatpush.msra.mxu0 %v416
    %1280 = vmatpush.msra.mxu0 %v414
    %1281 = vmatpush.msra.mxu0 %v412
    %1282 = vmatpush.msra.mxu0 %v410
    %1283 = vmatpush.msra.mxu0 %v408
    %1284 = vmatpush.msra.mxu0 %v406
    %1285 = vmatpush.msra.mxu0 %v404
    %1286 = vmatpush.msra.mxu0 %v402
    %1287 = vmatpush.msra.mxu0 %v400
    %1288 = vmatpush.msra.mxu0 %v398
    %1289 = vmatmul.f32.gmra.mxu0 %v154
    %v1290 = vpop.f32.mrf.mxu0
    %v1291 = vadd.f32 %v1223, %v1290
    %1292 = vmatmul.f32.gmra.mxu0 %v161
    %v1293 = vpop.f32.mrf.mxu0
    %v1294 = vadd.f32 %v1226, %v1293
    %1295 = vmatmul.f32.gmra.mxu0 %v168
    %v1296 = vpop.f32.mrf.mxu0
    %v1297 = vadd.f32 %v1229, %v1296
    %1298 = vmatmul.f32.gmra.mxu0 %v175
    %v1299 = vpop.f32.mrf.mxu0
    %v1300 = vadd.f32 %v1232, %v1299
    %1301 = vmatmul.f32.gmra.mxu0 %v182
    %v1302 = vpop.f32.mrf.mxu0
    %v1303 = vadd.f32 %v1235, %v1302
    %1304 = vmatmul.f32.gmra.mxu0 %v189
    %v1305 = vpop.f32.mrf.mxu0
    %v1306 = vadd.f32 %v1238, %v1305
    %1307 = vmatmul.f32.gmra.mxu0 %v196
    %v1308 = vpop.f32.mrf.mxu0
    %v1309 = vadd.f32 %v1241, %v1308
    %1310 = vmatmul.f32.gmra.mxu0 %v203
    %v1311 = vpop.f32.mrf.mxu0
    %v1312 = vadd.f32 %v1244, %v1311
    %1313 = vmatmul.f32.gmra.mxu0 %v210
    %v1314 = vpop.f32.mrf.mxu0
    %v1315 = vadd.f32 %v1247, %v1314
    %1316 = vmatmul.f32.gmra.mxu0 %v217
    %v1317 = vpop.f32.mrf.mxu0
    %v1318 = vadd.f32 %v1250, %v1317
    %1319 = vmatmul.f32.gmra.mxu0 %v224
    %v1320 = vpop.f32.mrf.mxu0
    %v1321 = vadd.f32 %v1253, %v1320
    %1322 = vmatmul.f32.gmra.mxu0 %v231
    %v1323 = vpop.f32.mrf.mxu0
    %v1324 = vadd.f32 %v1256, %v1323
    %1325 = vmatmul.f32.gmra.mxu0 %v238
    %v1326 = vpop.f32.mrf.mxu0
    %v1327 = vadd.f32 %v1259, %v1326
    %1328 = vmatmul.f32.gmra.mxu0 %v245
    %v1329 = vpop.f32.mrf.mxu0
    %v1330 = vadd.f32 %v1262, %v1329
    %1331 = vmatmul.f32.gmra.mxu0 %v252
    %v1332 = vpop.f32.mrf.mxu0
    %v1333 = vadd.f32 %v1265, %v1332
    %1334 = vmatmul.f32.gmra.mxu0 %v259
    %v1335 = vpop.f32.mrf.mxu0
    %v1336 = vadd.f32 %v1268, %v1335
    %1337 = vmatmul.f32.gmra.mxu0 %v266
    %v1338 = vpop.f32.mrf.mxu0
    %v1339 = vadd.f32 %v1271, %v1338
    %1340 = vdwg.mxu0
    %1341 = vmatpush.msra.mxu0 %v460
    %1342 = vmatpush.msra.mxu0 %v458
    %1343 = vmatpush.msra.mxu0 %v456
    %1344 = vmatpush.msra.mxu0 %v454
    %1345 = vmatpush.msra.mxu0 %v452
    %1346 = vmatpush.msra.mxu0 %v450
    %1347 = vmatpush.msra.mxu0 %v448
    %1348 = vmatpush.msra.mxu0 %v446
    %1349 = vmatpush.msra.mxu0 %v444
    %1350 = vmatpush.msra.mxu0 %v442
    %1351 = vmatpush.msra.mxu0 %v440
    %1352 = vmatpush.msra.mxu0 %v438
    %1353 = vmatpush.msra.mxu0 %v436
    %1354 = vmatpush.msra.mxu0 %v434
    %1355 = vmatpush.msra.mxu0 %v432
    %1356 = vmatpush.msra.mxu0 %v430
    %1357 = vmatmul.f32.gmra.mxu0 %v155
    %v1358 = vpop.f32.mrf.mxu0
    %v1359 = vadd.f32 %v1291, %v1358
    %1360 = vmatmul.f32.gmra.mxu0 %v162
    %v1361 = vpop.f32.mrf.mxu0
    %v1362 = vadd.f32 %v1294, %v1361
    %1363 = vmatmul.f32.gmra.mxu0 %v169
    %v1364 = vpop.f32.mrf.mxu0
    %v1365 = vadd.f32 %v1297, %v1364
    %1366 = vmatmul.f32.gmra.mxu0 %v176
    %v1367 = vpop.f32.mrf.mxu0
    %v1368 = vadd.f32 %v1300, %v1367
    %1369 = vmatmul.f32.gmra.mxu0 %v183
    %v1370 = vpop.f32.mrf.mxu0
    %v1371 = vadd.f32 %v1303, %v1370
    %1372 = vmatmul.f32.gmra.mxu0 %v190
    %v1373 = vpop.f32.mrf.mxu0
    %v1374 = vadd.f32 %v1306, %v1373
    %1375 = vmatmul.f32.gmra.mxu0 %v197
    %v1376 = vpop.f32.mrf.mxu0
    %v1377 = vadd.f32 %v1309, %v1376
    %1378 = vmatmul.f32.gmra.mxu0 %v204
    %v1379 = vpop.f32.mrf.mxu0
    %v1380 = vadd.f32 %v1312, %v1379
    %1381 = vmatmul.f32.gmra.mxu0 %v211
    %v1382 = vpop.f32.mrf.mxu0
    %v1383 = vadd.f32 %v1315, %v1382
    %1384 = vmatmul.f32.gmra.mxu0 %v218
    %v1385 = vpop.f32.mrf.mxu0
    %v1386 = vadd.f32 %v1318, %v1385
    %1387 = vmatmul.f32.gmra.mxu0 %v225
    %v1388 = vpop.f32.mrf.mxu0
    %v1389 = vadd.f32 %v1321, %v1388
    %1390 = vmatmul.f32.gmra.mxu0 %v232
    %v1391 = vpop.f32.mrf.mxu0
    %v1392 = vadd.f32 %v1324, %v1391
    %1393 = vmatmul.f32.gmra.mxu0 %v239
    %v1394 = vpop.f32.mrf.mxu0
    %v1395 = vadd.f32 %v1327, %v1394
    %1396 = vmatmul.f32.gmra.mxu0 %v246
    %v1397 = vpop.f32.mrf.mxu0
    %v1398 = vadd.f32 %v1330, %v1397
    %1399 = vmatmul.f32.gmra.mxu0 %v253
    %v1400 = vpop.f32.mrf.mxu0
    %v1401 = vadd.f32 %v1333, %v1400
    %1402 = vmatmul.f32.gmra.mxu0 %v260
    %v1403 = vpop.f32.mrf.mxu0
    %v1404 = vadd.f32 %v1336, %v1403
    %1405 = vmatmul.f32.gmra.mxu0 %v267
    %v1406 = vpop.f32.mrf.mxu0
    %v1407 = vadd.f32 %v1339, %v1406
    %1408 = vdwg.mxu0
    %1409 = vmatpush.msra.mxu0 0.0
    %1410 = vmatpush.msra.mxu0 0.0
    %1411 = vmatpush.msra.mxu0 0.0
    %1412 = vmatpush.msra.mxu0 0.0
    %1413 = vmatpush.msra.mxu0 0.0
    %1414 = vmatpush.msra.mxu0 0.0
    %1415 = vmatpush.msra.mxu0 0.0
    %1416 = vmatpush.msra.mxu0 0.0
    %1417 = vmatpush.msra.mxu0 0.0
    %1418 = vmatpush.msra.mxu0 0.0
    %1419 = vmatpush.msra.mxu0 %v472
    %1420 = vmatpush.msra.mxu0 %v470
    %1421 = vmatpush.msra.mxu0 %v468
    %1422 = vmatpush.msra.mxu0 %v466
    %1423 = vmatpush.msra.mxu0 %v464
    %1424 = vmatpush.msra.mxu0 %v462
    %1425 = vmatmul.f32.gmra.mxu0 %v475
    %v1426 = vpop.f32.mrf.mxu0
    %v1427 = vadd.f32 %v1359, %v1426
    %1428 = vmatmul.f32.gmra.mxu0 %v478
    %v1429 = vpop.f32.mrf.mxu0
    %v1430 = vadd.f32 %v1362, %v1429
    %1431 = vmatmul.f32.gmra.mxu0 %v481
    %v1432 = vpop.f32.mrf.mxu0
    %v1433 = vadd.f32 %v1365, %v1432
    %1434 = vmatmul.f32.gmra.mxu0 %v484
    %v1435 = vpop.f32.mrf.mxu0
    %v1436 = vadd.f32 %v1368, %v1435
    %1437 = vmatmul.f32.gmra.mxu0 %v487
    %v1438 = vpop.f32.mrf.mxu0
    %v1439 = vadd.f32 %v1371, %v1438
    %1440 = vmatmul.f32.gmra.mxu0 %v490
    %v1441 = vpop.f32.mrf.mxu0
    %v1442 = vadd.f32 %v1374, %v1441
    %1443 = vmatmul.f32.gmra.mxu0 %v493
    %v1444 = vpop.f32.mrf.mxu0
    %v1445 = vadd.f32 %v1377, %v1444
    %1446 = vmatmul.f32.gmra.mxu0 %v496
    %v1447 = vpop.f32.mrf.mxu0
    %v1448 = vadd.f32 %v1380, %v1447
    %1449 = vmatmul.f32.gmra.mxu0 %v499
    %v1450 = vpop.f32.mrf.mxu0
    %v1451 = vadd.f32 %v1383, %v1450
    %1452 = vmatmul.f32.gmra.mxu0 %v502
    %v1453 = vpop.f32.mrf.mxu0
    %v1454 = vadd.f32 %v1386, %v1453
    %1455 = vmatmul.f32.gmra.mxu0 %v505
    %v1456 = vpop.f32.mrf.mxu0
    %v1457 = vadd.f32 %v1389, %v1456
    %1458 = vmatmul.f32.gmra.mxu0 %v508
    %v1459 = vpop.f32.mrf.mxu0
    %v1460 = vadd.f32 %v1392, %v1459
    %1461 = vmatmul.f32.gmra.mxu0 %v511
    %v1462 = vpop.f32.mrf.mxu0
    %v1463 = vadd.f32 %v1395, %v1462
    %1464 = vmatmul.f32.gmra.mxu0 %v514
    %v1465 = vpop.f32.mrf.mxu0
    %v1466 = vadd.f32 %v1398, %v1465
    %1467 = vmatmul.f32.gmra.mxu0 %v517
    %v1468 = vpop.f32.mrf.mxu0
    %v1469 = vadd.f32 %v1401, %v1468
    %1470 = vmatmul.f32.gmra.mxu0 %v520
    %v1471 = vpop.f32.mrf.mxu0
    %v1472 = vadd.f32 %v1404, %v1471
    %1473 = vmatmul.f32.gmra.mxu0 %v523
    %v1474 = vpop.f32.mrf.mxu0
    %v1475 = vadd.f32 %v1407, %v1474
    %1476 = vdwg.mxu0
    %1477 = vst [vmem:[#allocation2] sm:$0xff] %v951
    %vm1478 = vcmask 556032
    %1479 = vst.msk [vmem:[#allocation2 + $0x8] sm:$0xff] %vm1478, %v1427
    %1480 = vst [vmem:[#allocation2 + $0x10] sm:$0xff] %v954
    %1481 = vst.msk [vmem:[#allocation2 + $0x18] sm:$0xff] %vm1478, %v1430
    %1482 = vst [vmem:[#allocation2 + $0x20] sm:$0xff] %v957
    %1483 = vst.msk [vmem:[#allocation2 + $0x28] sm:$0xff] %vm1478, %v1433
    %1484 = vst [vmem:[#allocation2 + $0x30] sm:$0xff] %v960
    %1485 = vst.msk [vmem:[#allocation2 + $0x38] sm:$0xff] %vm1478, %v1436
    %1486 = vst [vmem:[#allocation2 + $0x40] sm:$0xff] %v963
    %1487 = vst.msk [vmem:[#allocation2 + $0x48] sm:$0xff] %vm1478, %v1439
    %1488 = vst [vmem:[#allocation2 + $0x50] sm:$0xff] %v966
    %1489 = vst.msk [vmem:[#allocation2 + $0x58] sm:$0xff] %vm1478, %v1442
    %1490 = vst [vmem:[#allocation2 + $0x60] sm:$0xff] %v969
    %1491 = vst.msk [vmem:[#allocation2 + $0x68] sm:$0xff] %vm1478, %v1445
    %1492 = vst [vmem:[#allocation2 + $0x70] sm:$0xff] %v972
    %1493 = vst.msk [vmem:[#allocation2 + $0x78] sm:$0xff] %vm1478, %v1448
    %1494 = vst [vmem:[#allocation2 + $0x80] sm:$0xff] %v975
    %1495 = vst.msk [vmem:[#allocation2 + $0x88] sm:$0xff] %vm1478, %v1451
    %1496 = vst [vmem:[#allocation2 + $0x90] sm:$0xff] %v978
    %1497 = vst.msk [vmem:[#allocation2 + $0x98] sm:$0xff] %vm1478, %v1454
    %1498 = vst [vmem:[#allocation2 + $0xa0] sm:$0xff] %v981
    %1499 = vst.msk [vmem:[#allocation2 + $0xa8] sm:$0xff] %vm1478, %v1457
    %1500 = vst [vmem:[#allocation2 + $0xb0] sm:$0xff] %v984
    %1501 = vst.msk [vmem:[#allocation2 + $0xb8] sm:$0xff] %vm1478, %v1460
    %1502 = vst [vmem:[#allocation2 + $0xc0] sm:$0xff] %v987
    %1503 = vst.msk [vmem:[#allocation2 + $0xc8] sm:$0xff] %vm1478, %v1463
    %1504 = vst [vmem:[#allocation2 + $0xd0] sm:$0xff] %v990
    %1505 = vst.msk [vmem:[#allocation2 + $0xd8] sm:$0xff] %vm1478, %v1466
    %1506 = vst [vmem:[#allocation2 + $0xe0] sm:$0xff] %v993
    %1507 = vst.msk [vmem:[#allocation2 + $0xe8] sm:$0xff] %vm1478, %v1469
    %1508 = vst [vmem:[#allocation2 + $0xf0] sm:$0xff] %v996
    %1509 = vst.msk [vmem:[#allocation2 + $0xf8] sm:$0xff] %vm1478, %v1472
    %1510 = vst [vmem:[#allocation2 + $0x100] sm:$0xff] %v999
    %1511 = vst.msk [vmem:[#allocation2 + $0x108] sm:$0xff] %vm1478, %v1475
    // Predicated region
    $region14: #{tpu_custom_call.1} parent=1 // pred_check
      _
    $region15: #{tpu_custom_call.1} parent=1 // pred_check_branch
      %1513 = sbr.rel (0) target = $region17
    $region16: #{tpu_custom_call.1} parent=1 // pred_region
      %1515 = vsyncadd [#allocation3], 0
      %s1516 = sshll.u32 [#allocation2], 4
      %s1517 = int_to_ptr.vmem [resolvable:$true] %s1516
      %s1518 = sshll.u32 %s3, 4
      %s1519 = int_to_ptr.hbm [resolvable:$true] %s1518
      %1524 = dma.vmem_to_hbm [thread:$0]  %s1517, 4352, %s1519, [#allocation3], 256, 256, 16
    $region17: #{tpu_custom_call.1} parent=1 // pred_fallthru
      _
    // Predicated region
    $region18: #{tpu_custom_call.1} parent=1 // pred_check
      _
    $region19: #{tpu_custom_call.1} parent=1 // pred_check_branch
      %1526 = sbr.rel (0) target = $region21
    $region20: #{tpu_custom_call.1} parent=1 // pred_region
      %1528 = dma.done [#allocation3], 4352
    $region21: #{tpu_custom_call.1} parent=1 // pred_fallthru
      _
    %1529 = vsyncpa [#allocation3], 1

</llo_original>
